<compile_context>
chip_gen: v6e
topology: v6e:2x2x1
jax: 0.10.0
libtpu: 0.0.40
codegen_flags: <defaults>
</compile_context>

<pallas_src>
import functools

import jax
import jax.numpy as jnp
from jax.experimental import pallas as pl
from jax.experimental.pallas import tpu as pltpu

OUT_DIM = 10            # real logit width of every LayerBase head
OUT_PAD = 128           # lane-dense padded logit width
K_REAL = 28 * 28 * 2    # 1568 flattened NCHW colored-MNIST pixels (no K pad)


def _round_up(v, m):
    return ((v + m - 1) // m) * m


def _masked_softmax(logits_f32):
    """Row softmax over 128 lanes; padded lanes carry -1e30 bias -> exp()=0."""
    m = jnp.max(logits_f32, axis=-1, keepdims=True)
    e = jnp.exp(logits_f32 - m)
    s = jnp.sum(e, axis=-1, keepdims=True)
    return e * pl.reciprocal(s, approx=True)


def _mlp_tail(h1_bf16, w2, b2, w3, b3):
    """softmax(relu(h1 @ W2 + b2) @ W3 + b3) — layers 2..3 of a head."""
    h2 = jnp.maximum(
        jnp.dot(h1_bf16, w2[...], preferred_element_type=jnp.float32) + b2[...], 0.0)
    logits = jnp.dot(h2.astype(jnp.bfloat16), w3[...],
                     preferred_element_type=jnp.float32) + b3[...]
    return _masked_softmax(logits)


def _mlp_full(x_bf16, w1, b1, w2, b2, w3, b3):
    """Full 3-layer MLP head (used for phi)."""
    h1 = jnp.maximum(
        jnp.dot(x_bf16, w1[...], preferred_element_type=jnp.float32) + b1[...], 0.0)
    return _mlp_tail(h1.astype(jnp.bfloat16), w2, b2, w3, b3)


def _fused_model_kernel(x_ref,
                        pw1, pb1, pw2, pb2, pw3, pb3,
                        fgw1, fgb1,
                        fw2, fb2, fw3, fb3,
                        gw2, gb2, gw3, gb3,
                        out_ref):
    # x: f32 in HBM/VMEM -> bf16 in-register (no XLA pre-pass).
    x_bf = x_ref[...].astype(jnp.bfloat16)                       # (TB, 1568)

    # phi head: softmax probabilities, lanes 10..127 are exactly 0.
    phi = _mlp_full(x_bf, pw1, pb1, pw2, pb2, pw3, pb3)          # (TB, 128) f32
    phi_bf = phi.astype(jnp.bfloat16)

    # f & g first layers fused: one (TB,128)x(128,256) matmul on the shared input.
    h1 = jnp.maximum(
        jnp.dot(phi_bf, fgw1[...], preferred_element_type=jnp.float32) + fgb1[...],
        0.0)                                                     # (TB, 256) f32
    hp = fgw1.shape[1] // 2
    h1_f = h1[:, :hp].astype(jnp.bfloat16)
    h1_g = h1[:, hp:].astype(jnp.bfloat16)

    yf = _mlp_tail(h1_f, fw2, fb2, fw3, fb3)                     # (TB, 128) f32
    yg = _mlp_tail(h1_g, gw2, gb2, gw3, gb3)                     # (TB, 128) f32

    out_ref[0, :, :] = yf.astype(out_ref.dtype)
    out_ref[1, :, :] = yg.astype(out_ref.dtype)


def _choose_tile(B, tb):
    """Batch tile: multiple of 16, <= tb, and >=2 grid steps when B allows."""
    TB = _round_up(min(tb, _round_up(B, 16)), 16)
    if B > 16 and -(-B // TB) < 2:           # give v7x's 2nd TensorCore work
        TB = _round_up(-(-B // 2), 16)
    return TB


@functools.partial(jax.jit, static_argnames=("tb",))
def model_forward(x_nchw, params, tb=512):
    """Model.forward: concat([f(phi(x)), g(phi(x))], axis=0) -> (2B, 10)."""
    B = x_nchw.shape[0]
    x = x_nchw.reshape(B, -1)                                    # (B, 1568) f32 view
    assert x.shape[1] == K_REAL, x.shape

    TB = _choose_tile(B, tb)
    steps = -(-B // TB)
    Bp = steps * TB
    if Bp != B:
        # Only pads when B is not a multiple of TB (no-op for aligned batches).
        x = jnp.pad(x, ((0, Bp - B), (0, 0)))

    phi, fg1, f, g = params["phi"], params["fg1"], params["f"], params["g"]
    weights = [phi["w1"], phi["b1"], phi["w2"], phi["b2"], phi["w3"], phi["b3"],
               fg1["w"], fg1["b"],
               f["w2"], f["b2"], f["w3"], f["b3"],
               g["w2"], g["b2"], g["w3"], g["b3"]]

    def const_spec(a):
        # Whole-array block, same tile for every batch-grid step (fetched once).
        return pl.BlockSpec(a.shape, lambda i: (0,) * a.ndim)

    x_spec = pl.BlockSpec((TB, K_REAL), lambda i: (i, 0))
    out_spec = pl.BlockSpec((2, TB, OUT_PAD), lambda i: (0, i, 0))

    packed = pl.pallas_call(
        _fused_model_kernel,
        grid=(steps,),
        in_specs=[x_spec] + [const_spec(a) for a in weights],
        out_specs=out_spec,
        out_shape=jax.ShapeDtypeStruct((2, Bp, OUT_PAD), jnp.bfloat16),
        compiler_params=pltpu.CompilerParams(
            dimension_semantics=("parallel",)),
    )(x, *weights)

    # f rows first, then g rows — matches torch.cat([y, z], axis=0).
    return packed[:, :B, :OUT_DIM].astype(jnp.float32).reshape(2 * B, OUT_DIM)


# ----------------------------- parameter init -----------------------------

def _xavier(key, fan_in, fan_out, pad_in, pad_out):
    """xavier_uniform_ (PyTorch), stored (in, out) = weight.T, zero-padded, bf16."""
    bound = (6.0 / (fan_in + fan_out)) ** 0.5
    w = jax.random.uniform(key, (fan_in, fan_out), jnp.float32, -bound, bound)
    w = jnp.pad(w, ((0, pad_in - fan_in), (0, pad_out - fan_out)))
    return w.astype(jnp.bfloat16)


def _masked_b3(out_dim, out_pad):
    # Keep in f32: the -1e30 mask relies on the f32 bias-add path in the kernel.
    return jnp.concatenate(
        [jnp.zeros((1, out_dim), jnp.float32),
         jnp.full((1, out_pad - out_dim), -1e30, jnp.float32)], axis=1)


def init_model_params(key, hidden_dim):
    hid_pad = max(128, _round_up(hidden_dim, 128))
    # TODO(synk): on v5e, the 32->128 hidden pad quadruples phi-layer-1 FLOPs;
    # consider int8 phi.w1 there if v5e throughput ever dominates.
    ks = jax.random.split(key, 9)

    phi = {
        "w1": _xavier(ks[0], K_REAL, hidden_dim, K_REAL, hid_pad),   # (1568,128), no K pad
        "b1": jnp.zeros((1, hid_pad), jnp.float32),
        "w2": _xavier(ks[1], hidden_dim, hidden_dim, hid_pad, hid_pad),
        "b2": jnp.zeros((1, hid_pad), jnp.float32),
        "w3": _xavier(ks[2], hidden_dim, OUT_DIM, hid_pad, OUT_PAD),
        "b3": _masked_b3(OUT_DIM, OUT_PAD),
    }
    # f / g first layers fused along the output dim -> (128, 2*hid_pad) bf16.
    f_w1 = _xavier(ks[3], OUT_DIM, hidden_dim, OUT_PAD, hid_pad)
    g_w1 = _xavier(ks[6], OUT_DIM, hidden_dim, OUT_PAD, hid_pad)
    fg1 = {
        "w": jnp.concatenate([f_w1, g_w1], axis=1),
        "b": jnp.zeros((1, 2 * hid_pad), jnp.float32),
    }
    f = {
        "w2": _xavier(ks[4], hidden_dim, hidden_dim, hid_pad, hid_pad),
        "b2": jnp.zeros((1, hid_pad), jnp.float32),
        "w3": _xavier(ks[5], hidden_dim, OUT_DIM, hid_pad, OUT_PAD),
        "b3": _masked_b3(OUT_DIM, OUT_PAD),
    }
    g = {
        "w2": _xavier(ks[7], hidden_dim, hidden_dim, hid_pad, hid_pad),
        "b2": jnp.zeros((1, hid_pad), jnp.float32),
        "w3": _xavier(ks[8], hidden_dim, OUT_DIM, hid_pad, OUT_PAD),
        "b3": _masked_b3(OUT_DIM, OUT_PAD),
    }
    return {"phi": phi, "fg1": fg1, "f": f, "g": g}


if __name__ == "__main__":
    key = jax.random.PRNGKey(0)
    kx, kp = jax.random.split(key)

    hidden_dim = 32
    batch = 2
    x = jax.random.normal(kx, (batch, 2, 28, 28), jnp.float32)   # NCHW colored-MNIST input
    params = init_model_params(kp, hidden_dim)

    out = model_forward(x, params)
    out = jax.block_until_ready(out)

    assert out.shape == (2 * batch, OUT_DIM), out.shape
    # each row is a softmax distribution -> sums to ~1 (bf16 matmuls/output + approx recip)
    assert bool(jnp.allclose(jnp.sum(out, axis=1), 1.0, atol=2e-2)), jnp.sum(out, axis=1)
    print("KERNEL_OK")
</pallas_src>

<mosaic_0001>
module attributes {stable_mosaic.version = 11 : i64} {
  func.func @_fused_model_kernel(%arg0: i32, %arg1: memref<16x1568xf32, #tpu.memory_space<vmem>>, %arg2: memref<1568x128xbf16, #tpu.memory_space<vmem>>, %arg3: memref<1x128xf32, #tpu.memory_space<vmem>>, %arg4: memref<128x128xbf16, #tpu.memory_space<vmem>>, %arg5: memref<1x128xf32, #tpu.memory_space<vmem>>, %arg6: memref<128x128xbf16, #tpu.memory_space<vmem>>, %arg7: memref<1x128xf32, #tpu.memory_space<vmem>>, %arg8: memref<128x256xbf16, #tpu.memory_space<vmem>>, %arg9: memref<1x256xf32, #tpu.memory_space<vmem>>, %arg10: memref<128x128xbf16, #tpu.memory_space<vmem>>, %arg11: memref<1x128xf32, #tpu.memory_space<vmem>>, %arg12: memref<128x128xbf16, #tpu.memory_space<vmem>>, %arg13: memref<1x128xf32, #tpu.memory_space<vmem>>, %arg14: memref<128x128xbf16, #tpu.memory_space<vmem>>, %arg15: memref<1x128xf32, #tpu.memory_space<vmem>>, %arg16: memref<128x128xbf16, #tpu.memory_space<vmem>>, %arg17: memref<1x128xf32, #tpu.memory_space<vmem>>, %arg18: memref<2x16x128xbf16, #tpu.memory_space<vmem>>) attributes {dimension_semantics = [#tpu.dimension_semantics<parallel>], iteration_bounds = array<i64: 1>, scalar_prefetch = 0 : i64, scratch_operands = 0 : i64, tpu.core_type = #tpu.core_type<tc>, window_params = [{transform_indices = @transform_0, window_bounds = array<i64: 16, 1568>}, {pipeline_mode = #tpu.pipeline_mode<synchronous>, transform_indices = @transform_1, window_bounds = array<i64: 1568, 128>}, {pipeline_mode = #tpu.pipeline_mode<synchronous>, transform_indices = @transform_2, window_bounds = array<i64: 1, 128>}, {pipeline_mode = #tpu.pipeline_mode<synchronous>, transform_indices = @transform_3, window_bounds = array<i64: 128, 128>}, {pipeline_mode = #tpu.pipeline_mode<synchronous>, transform_indices = @transform_4, window_bounds = array<i64: 1, 128>}, {pipeline_mode = #tpu.pipeline_mode<synchronous>, transform_indices = @transform_5, window_bounds = array<i64: 128, 128>}, {pipeline_mode = #tpu.pipeline_mode<synchronous>, transform_indices = @transform_6, window_bounds = array<i64: 1, 128>}, {pipeline_mode = #tpu.pipeline_mode<synchronous>, transform_indices = @transform_7, window_bounds = array<i64: 128, 256>}, {pipeline_mode = #tpu.pipeline_mode<synchronous>, transform_indices = @transform_8, window_bounds = array<i64: 1, 256>}, {pipeline_mode = #tpu.pipeline_mode<synchronous>, transform_indices = @transform_9, window_bounds = array<i64: 128, 128>}, {pipeline_mode = #tpu.pipeline_mode<synchronous>, transform_indices = @transform_10, window_bounds = array<i64: 1, 128>}, {pipeline_mode = #tpu.pipeline_mode<synchronous>, transform_indices = @transform_11, window_bounds = array<i64: 128, 128>}, {pipeline_mode = #tpu.pipeline_mode<synchronous>, transform_indices = @transform_12, window_bounds = array<i64: 1, 128>}, {pipeline_mode = #tpu.pipeline_mode<synchronous>, transform_indices = @transform_13, window_bounds = array<i64: 128, 128>}, {pipeline_mode = #tpu.pipeline_mode<synchronous>, transform_indices = @transform_14, window_bounds = array<i64: 1, 128>}, {pipeline_mode = #tpu.pipeline_mode<synchronous>, transform_indices = @transform_15, window_bounds = array<i64: 128, 128>}, {pipeline_mode = #tpu.pipeline_mode<synchronous>, transform_indices = @transform_16, window_bounds = array<i64: 1, 128>}, {transform_indices = @transform_17, window_bounds = array<i64: 2, 16, 128>}]} {
    %c0 = arith.constant 0 : index
    %c0_0 = arith.constant 0 : index
    %0 = vector.load %arg1[%c0, %c0_0] : memref<16x1568xf32, #tpu.memory_space<vmem>>, vector<16x1568xf32>
    %1 = arith.truncf %0 : vector<16x1568xf32> to vector<16x1568xbf16>
    %c0_1 = arith.constant 0 : index
    %c0_2 = arith.constant 0 : index
    %2 = vector.load %arg2[%c0_1, %c0_2] : memref<1568x128xbf16, #tpu.memory_space<vmem>>, vector<1568x128xbf16>
    %cst = arith.constant dense<0.000000e+00> : vector<16x128xf32>
    %3 = tpu.matmul %1, %2, %cst {dimension_numbers = #tpu.dot_dimension_numbers<[1], [0], [0], [1], [0, 0, 1, 1], [], []>} : vector<16x1568xbf16>, vector<1568x128xbf16>, vector<16x128xf32> -> vector<16x128xf32>
    %c0_3 = arith.constant 0 : index
    %c0_4 = arith.constant 0 : index
    %4 = vector.load %arg3[%c0_3, %c0_4] : memref<1x128xf32, #tpu.memory_space<vmem>>, vector<1x128xf32>
    %5 = vector.broadcast %4 : vector<1x128xf32> to vector<16x128xf32>
    %6 = arith.addf %3, %5 : vector<16x128xf32>
    %cst_5 = arith.constant 0.000000e+00 : f32
    %7 = vector.broadcast %cst_5 : f32 to vector<16x128xf32>
    %8 = arith.maximumf %6, %7 : vector<16x128xf32>
    %9 = arith.truncf %8 : vector<16x128xf32> to vector<16x128xbf16>
    %c0_6 = arith.constant 0 : index
    %c0_7 = arith.constant 0 : index
    %10 = vector.load %arg4[%c0_6, %c0_7] : memref<128x128xbf16, #tpu.memory_space<vmem>>, vector<128x128xbf16>
    %cst_8 = arith.constant dense<0.000000e+00> : vector<16x128xf32>
    %11 = tpu.matmul %9, %10, %cst_8 {dimension_numbers = #tpu.dot_dimension_numbers<[1], [0], [0], [1], [0, 0, 1, 1], [], []>} : vector<16x128xbf16>, vector<128x128xbf16>, vector<16x128xf32> -> vector<16x128xf32>
    %c0_9 = arith.constant 0 : index
    %c0_10 = arith.constant 0 : index
    %12 = vector.load %arg5[%c0_9, %c0_10] : memref<1x128xf32, #tpu.memory_space<vmem>>, vector<1x128xf32>
    %13 = vector.broadcast %12 : vector<1x128xf32> to vector<16x128xf32>
    %14 = arith.addf %11, %13 : vector<16x128xf32>
    %cst_11 = arith.constant 0.000000e+00 : f32
    %15 = vector.broadcast %cst_11 : f32 to vector<16x128xf32>
    %16 = arith.maximumf %14, %15 : vector<16x128xf32>
    %17 = arith.truncf %16 : vector<16x128xf32> to vector<16x128xbf16>
    %c0_12 = arith.constant 0 : index
    %c0_13 = arith.constant 0 : index
    %18 = vector.load %arg6[%c0_12, %c0_13] : memref<128x128xbf16, #tpu.memory_space<vmem>>, vector<128x128xbf16>
    %cst_14 = arith.constant dense<0.000000e+00> : vector<16x128xf32>
    %19 = tpu.matmul %17, %18, %cst_14 {dimension_numbers = #tpu.dot_dimension_numbers<[1], [0], [0], [1], [0, 0, 1, 1], [], []>} : vector<16x128xbf16>, vector<128x128xbf16>, vector<16x128xf32> -> vector<16x128xf32>
    %c0_15 = arith.constant 0 : index
    %c0_16 = arith.constant 0 : index
    %20 = vector.load %arg7[%c0_15, %c0_16] : memref<1x128xf32, #tpu.memory_space<vmem>>, vector<1x128xf32>
    %21 = vector.broadcast %20 : vector<1x128xf32> to vector<16x128xf32>
    %22 = arith.addf %19, %21 : vector<16x128xf32>
    %cst_17 = arith.constant dense<0xFF800000> : vector<16xf32>
    %23 = vector.multi_reduction <maximumf>, %22, %cst_17 [1] : vector<16x128xf32> to vector<16xf32>
    %24 = vector.shape_cast %23 : vector<16xf32> to vector<16x1xf32>
    %25 = vector.broadcast %24 : vector<16x1xf32> to vector<16x128xf32>
    %26 = arith.subf %22, %25 : vector<16x128xf32>
    %27 = math.exp %26 : vector<16x128xf32>
    %cst_18 = arith.constant dense<0.000000e+00> : vector<16xf32>
    %28 = vector.multi_reduction <add>, %27, %cst_18 [1] : vector<16x128xf32> to vector<16xf32>
    %29 = vector.shape_cast %28 : vector<16xf32> to vector<16x1xf32>
    %30 = tpu.reciprocal %29 {approx = true} : vector<16x1xf32> -> vector<16x1xf32>
    %31 = vector.broadcast %30 : vector<16x1xf32> to vector<16x128xf32>
    %32 = arith.mulf %27, %31 : vector<16x128xf32>
    %33 = arith.truncf %32 : vector<16x128xf32> to vector<16x128xbf16>
    %c0_19 = arith.constant 0 : index
    %c0_20 = arith.constant 0 : index
    %34 = vector.load %arg8[%c0_19, %c0_20] : memref<128x256xbf16, #tpu.memory_space<vmem>>, vector<128x256xbf16>
    %cst_21 = arith.constant dense<0.000000e+00> : vector<16x256xf32>
    %35 = tpu.matmul %33, %34, %cst_21 {dimension_numbers = #tpu.dot_dimension_numbers<[1], [0], [0], [1], [0, 0, 1, 1], [], []>} : vector<16x128xbf16>, vector<128x256xbf16>, vector<16x256xf32> -> vector<16x256xf32>
    %c0_22 = arith.constant 0 : index
    %c0_23 = arith.constant 0 : index
    %36 = vector.load %arg9[%c0_22, %c0_23] : memref<1x256xf32, #tpu.memory_space<vmem>>, vector<1x256xf32>
    %37 = vector.broadcast %36 : vector<1x256xf32> to vector<16x256xf32>
    %38 = arith.addf %35, %37 : vector<16x256xf32>
    %cst_24 = arith.constant 0.000000e+00 : f32
    %39 = vector.broadcast %cst_24 : f32 to vector<16x256xf32>
    %40 = arith.maximumf %38, %39 : vector<16x256xf32>
    %41 = vector.extract_strided_slice %40 {offsets = [0, 0], sizes = [16, 128], strides = [1, 1]} : vector<16x256xf32> to vector<16x128xf32>
    %42 = arith.truncf %41 : vector<16x128xf32> to vector<16x128xbf16>
    %43 = vector.extract_strided_slice %40 {offsets = [0, 128], sizes = [16, 128], strides = [1, 1]} : vector<16x256xf32> to vector<16x128xf32>
    %44 = arith.truncf %43 : vector<16x128xf32> to vector<16x128xbf16>
    %c0_25 = arith.constant 0 : index
    %c0_26 = arith.constant 0 : index
    %45 = vector.load %arg10[%c0_25, %c0_26] : memref<128x128xbf16, #tpu.memory_space<vmem>>, vector<128x128xbf16>
    %cst_27 = arith.constant dense<0.000000e+00> : vector<16x128xf32>
    %46 = tpu.matmul %42, %45, %cst_27 {dimension_numbers = #tpu.dot_dimension_numbers<[1], [0], [0], [1], [0, 0, 1, 1], [], []>} : vector<16x128xbf16>, vector<128x128xbf16>, vector<16x128xf32> -> vector<16x128xf32>
    %c0_28 = arith.constant 0 : index
    %c0_29 = arith.constant 0 : index
    %47 = vector.load %arg11[%c0_28, %c0_29] : memref<1x128xf32, #tpu.memory_space<vmem>>, vector<1x128xf32>
    %48 = vector.broadcast %47 : vector<1x128xf32> to vector<16x128xf32>
    %49 = arith.addf %46, %48 : vector<16x128xf32>
    %cst_30 = arith.constant 0.000000e+00 : f32
    %50 = vector.broadcast %cst_30 : f32 to vector<16x128xf32>
    %51 = arith.maximumf %49, %50 : vector<16x128xf32>
    %52 = arith.truncf %51 : vector<16x128xf32> to vector<16x128xbf16>
    %c0_31 = arith.constant 0 : index
    %c0_32 = arith.constant 0 : index
    %53 = vector.load %arg12[%c0_31, %c0_32] : memref<128x128xbf16, #tpu.memory_space<vmem>>, vector<128x128xbf16>
    %cst_33 = arith.constant dense<0.000000e+00> : vector<16x128xf32>
    %54 = tpu.matmul %52, %53, %cst_33 {dimension_numbers = #tpu.dot_dimension_numbers<[1], [0], [0], [1], [0, 0, 1, 1], [], []>} : vector<16x128xbf16>, vector<128x128xbf16>, vector<16x128xf32> -> vector<16x128xf32>
    %c0_34 = arith.constant 0 : index
    %c0_35 = arith.constant 0 : index
    %55 = vector.load %arg13[%c0_34, %c0_35] : memref<1x128xf32, #tpu.memory_space<vmem>>, vector<1x128xf32>
    %56 = vector.broadcast %55 : vector<1x128xf32> to vector<16x128xf32>
    %57 = arith.addf %54, %56 : vector<16x128xf32>
    %cst_36 = arith.constant dense<0xFF800000> : vector<16xf32>
    %58 = vector.multi_reduction <maximumf>, %57, %cst_36 [1] : vector<16x128xf32> to vector<16xf32>
    %59 = vector.shape_cast %58 : vector<16xf32> to vector<16x1xf32>
    %60 = vector.broadcast %59 : vector<16x1xf32> to vector<16x128xf32>
    %61 = arith.subf %57, %60 : vector<16x128xf32>
    %62 = math.exp %61 : vector<16x128xf32>
    %cst_37 = arith.constant dense<0.000000e+00> : vector<16xf32>
    %63 = vector.multi_reduction <add>, %62, %cst_37 [1] : vector<16x128xf32> to vector<16xf32>
    %64 = vector.shape_cast %63 : vector<16xf32> to vector<16x1xf32>
    %65 = tpu.reciprocal %64 {approx = true} : vector<16x1xf32> -> vector<16x1xf32>
    %66 = vector.broadcast %65 : vector<16x1xf32> to vector<16x128xf32>
    %67 = arith.mulf %62, %66 : vector<16x128xf32>
    %c0_38 = arith.constant 0 : index
    %c0_39 = arith.constant 0 : index
    %68 = vector.load %arg14[%c0_38, %c0_39] : memref<128x128xbf16, #tpu.memory_space<vmem>>, vector<128x128xbf16>
    %cst_40 = arith.constant dense<0.000000e+00> : vector<16x128xf32>
    %69 = tpu.matmul %44, %68, %cst_40 {dimension_numbers = #tpu.dot_dimension_numbers<[1], [0], [0], [1], [0, 0, 1, 1], [], []>} : vector<16x128xbf16>, vector<128x128xbf16>, vector<16x128xf32> -> vector<16x128xf32>
    %c0_41 = arith.constant 0 : index
    %c0_42 = arith.constant 0 : index
    %70 = vector.load %arg15[%c0_41, %c0_42] : memref<1x128xf32, #tpu.memory_space<vmem>>, vector<1x128xf32>
    %71 = vector.broadcast %70 : vector<1x128xf32> to vector<16x128xf32>
    %72 = arith.addf %69, %71 : vector<16x128xf32>
    %cst_43 = arith.constant 0.000000e+00 : f32
    %73 = vector.broadcast %cst_43 : f32 to vector<16x128xf32>
    %74 = arith.maximumf %72, %73 : vector<16x128xf32>
    %75 = arith.truncf %74 : vector<16x128xf32> to vector<16x128xbf16>
    %c0_44 = arith.constant 0 : index
    %c0_45 = arith.constant 0 : index
    %76 = vector.load %arg16[%c0_44, %c0_45] : memref<128x128xbf16, #tpu.memory_space<vmem>>, vector<128x128xbf16>
    %cst_46 = arith.constant dense<0.000000e+00> : vector<16x128xf32>
    %77 = tpu.matmul %75, %76, %cst_46 {dimension_numbers = #tpu.dot_dimension_numbers<[1], [0], [0], [1], [0, 0, 1, 1], [], []>} : vector<16x128xbf16>, vector<128x128xbf16>, vector<16x128xf32> -> vector<16x128xf32>
    %c0_47 = arith.constant 0 : index
    %c0_48 = arith.constant 0 : index
    %78 = vector.load %arg17[%c0_47, %c0_48] : memref<1x128xf32, #tpu.memory_space<vmem>>, vector<1x128xf32>
    %79 = vector.broadcast %78 : vector<1x128xf32> to vector<16x128xf32>
    %80 = arith.addf %77, %79 : vector<16x128xf32>
    %cst_49 = arith.constant dense<0xFF800000> : vector<16xf32>
    %81 = vector.multi_reduction <maximumf>, %80, %cst_49 [1] : vector<16x128xf32> to vector<16xf32>
    %82 = vector.shape_cast %81 : vector<16xf32> to vector<16x1xf32>
    %83 = vector.broadcast %82 : vector<16x1xf32> to vector<16x128xf32>
    %84 = arith.subf %80, %83 : vector<16x128xf32>
    %85 = math.exp %84 : vector<16x128xf32>
    %cst_50 = arith.constant dense<0.000000e+00> : vector<16xf32>
    %86 = vector.multi_reduction <add>, %85, %cst_50 [1] : vector<16x128xf32> to vector<16xf32>
    %87 = vector.shape_cast %86 : vector<16xf32> to vector<16x1xf32>
    %88 = tpu.reciprocal %87 {approx = true} : vector<16x1xf32> -> vector<16x1xf32>
    %89 = vector.broadcast %88 : vector<16x1xf32> to vector<16x128xf32>
    %90 = arith.mulf %85, %89 : vector<16x128xf32>
    %91 = arith.truncf %67 : vector<16x128xf32> to vector<16x128xbf16>
    %c0_51 = arith.constant 0 : index
    %c0_52 = arith.constant 0 : index
    %c0_53 = arith.constant 0 : index
    %92 = vector.load %arg18[%c0_51, %c0_52, %c0_53] : memref<2x16x128xbf16, #tpu.memory_space<vmem>>, vector<1x16x128xbf16>
    %93 = vector.shape_cast %92 : vector<1x16x128xbf16> to vector<16x128xbf16>
    %94 = vector.shape_cast %91 : vector<16x128xbf16> to vector<1x16x128xbf16>
    tpu.vector_store %arg18[%c0_51, %c0_52, %c0_53], %94 {strides = array<i32>} : memref<2x16x128xbf16, #tpu.memory_space<vmem>>, vector<1x16x128xbf16>,
    %95 = arith.truncf %90 : vector<16x128xf32> to vector<16x128xbf16>
    %c1 = arith.constant 1 : index
    %c0_54 = arith.constant 0 : index
    %c0_55 = arith.constant 0 : index
    %96 = vector.load %arg18[%c1, %c0_54, %c0_55] : memref<2x16x128xbf16, #tpu.memory_space<vmem>>, vector<1x16x128xbf16>
    %97 = vector.shape_cast %96 : vector<1x16x128xbf16> to vector<16x128xbf16>
    %98 = vector.shape_cast %95 : vector<16x128xbf16> to vector<1x16x128xbf16>
    tpu.vector_store %arg18[%c1, %c0_54, %c0_55], %98 {strides = array<i32>} : memref<2x16x128xbf16, #tpu.memory_space<vmem>>, vector<1x16x128xbf16>,
    return
  }
  func.func @transform_0(%arg0: i32) -> (i32, i32) {
    %c0_i32 = arith.constant 0 : i32
    %c0_i32_0 = arith.constant 0 : i32
    return %arg0, %c0_i32 : i32, i32
  }
  func.func @transform_1(%arg0: i32) -> (i32, i32) {
    %c0_i32 = arith.constant 0 : i32
    %c0_i32_0 = arith.constant 0 : i32
    %c0_i32_1 = arith.constant 0 : i32
    return %c0_i32, %c0_i32_0 : i32, i32
  }
  func.func @transform_2(%arg0: i32) -> (i32, i32) {
    %c0_i32 = arith.constant 0 : i32
    %c0_i32_0 = arith.constant 0 : i32
    %c0_i32_1 = arith.constant 0 : i32
    return %c0_i32, %c0_i32_0 : i32, i32
  }
  func.func @transform_3(%arg0: i32) -> (i32, i32) {
    %c0_i32 = arith.constant 0 : i32
    %c0_i32_0 = arith.constant 0 : i32
    %c0_i32_1 = arith.constant 0 : i32
    return %c0_i32, %c0_i32_0 : i32, i32
  }
  func.func @transform_4(%arg0: i32) -> (i32, i32) {
    %c0_i32 = arith.constant 0 : i32
    %c0_i32_0 = arith.constant 0 : i32
    %c0_i32_1 = arith.constant 0 : i32
    return %c0_i32, %c0_i32_0 : i32, i32
  }
  func.func @transform_5(%arg0: i32) -> (i32, i32) {
    %c0_i32 = arith.constant 0 : i32
    %c0_i32_0 = arith.constant 0 : i32
    %c0_i32_1 = arith.constant 0 : i32
    return %c0_i32, %c0_i32_0 : i32, i32
  }
  func.func @transform_6(%arg0: i32) -> (i32, i32) {
    %c0_i32 = arith.constant 0 : i32
    %c0_i32_0 = arith.constant 0 : i32
    %c0_i32_1 = arith.constant 0 : i32
    return %c0_i32, %c0_i32_0 : i32, i32
  }
  func.func @transform_7(%arg0: i32) -> (i32, i32) {
    %c0_i32 = arith.constant 0 : i32
    %c0_i32_0 = arith.constant 0 : i32
    %c0_i32_1 = arith.constant 0 : i32
    return %c0_i32, %c0_i32_0 : i32, i32
  }
  func.func @transform_8(%arg0: i32) -> (i32, i32) {
    %c0_i32 = arith.constant 0 : i32
    %c0_i32_0 = arith.constant 0 : i32
    %c0_i32_1 = arith.constant 0 : i32
    return %c0_i32, %c0_i32_0 : i32, i32
  }
  func.func @transform_9(%arg0: i32) -> (i32, i32) {
    %c0_i32 = arith.constant 0 : i32
    %c0_i32_0 = arith.constant 0 : i32
    %c0_i32_1 = arith.constant 0 : i32
    return %c0_i32, %c0_i32_0 : i32, i32
  }
  func.func @transform_10(%arg0: i32) -> (i32, i32) {
    %c0_i32 = arith.constant 0 : i32
    %c0_i32_0 = arith.constant 0 : i32
    %c0_i32_1 = arith.constant 0 : i32
    return %c0_i32, %c0_i32_0 : i32, i32
  }
  func.func @transform_11(%arg0: i32) -> (i32, i32) {
    %c0_i32 = arith.constant 0 : i32
    %c0_i32_0 = arith.constant 0 : i32
    %c0_i32_1 = arith.constant 0 : i32
    return %c0_i32, %c0_i32_0 : i32, i32
  }
  func.func @transform_12(%arg0: i32) -> (i32, i32) {
    %c0_i32 = arith.constant 0 : i32
    %c0_i32_0 = arith.constant 0 : i32
    %c0_i32_1 = arith.constant 0 : i32
    return %c0_i32, %c0_i32_0 : i32, i32
  }
  func.func @transform_13(%arg0: i32) -> (i32, i32) {
    %c0_i32 = arith.constant 0 : i32
    %c0_i32_0 = arith.constant 0 : i32
    %c0_i32_1 = arith.constant 0 : i32
    return %c0_i32, %c0_i32_0 : i32, i32
  }
  func.func @transform_14(%arg0: i32) -> (i32, i32) {
    %c0_i32 = arith.constant 0 : i32
    %c0_i32_0 = arith.constant 0 : i32
    %c0_i32_1 = arith.constant 0 : i32
    return %c0_i32, %c0_i32_0 : i32, i32
  }
  func.func @transform_15(%arg0: i32) -> (i32, i32) {
    %c0_i32 = arith.constant 0 : i32
    %c0_i32_0 = arith.constant 0 : i32
    %c0_i32_1 = arith.constant 0 : i32
    return %c0_i32, %c0_i32_0 : i32, i32
  }
  func.func @transform_16(%arg0: i32) -> (i32, i32) {
    %c0_i32 = arith.constant 0 : i32
    %c0_i32_0 = arith.constant 0 : i32
    %c0_i32_1 = arith.constant 0 : i32
    return %c0_i32, %c0_i32_0 : i32, i32
  }
  func.func @transform_17(%arg0: i32) -> (i32, i32, i32) {
    %c0_i32 = arith.constant 0 : i32
    %c0_i32_0 = arith.constant 0 : i32
    %c0_i32_1 = arith.constant 0 : i32
    return %c0_i32, %arg0, %c0_i32_0 : i32, i32, i32
  }
}

</mosaic_0001>

<llo_original>
// kernel: model_forward.1
$region0: #{model_forward.1}
  #allocation0 [shape = 'u32[]', space=smem, size = 0x4, offset = 0x4, fixed_abs, tag = 'smem constant byte address 0x4 - core index']
  #allocation1 [shape = 'u32[144,128]{1,0:T(1,128)}', space=vmem, size = 0x12000, scoped, tag = 'internal scratch']
  %s0 = inlined_call_operand.vmem [shape: f32[16,1568], index: 0, kind: input, shape index: {}]
  %s1 = inlined_call_operand.hbm [shape: bf16[1568,128], index: 1, kind: input, shape index: {}]
  %s2 = inlined_call_operand.vmem [shape: f32[1,128], index: 2, kind: input, shape index: {}]
  %s3 = inlined_call_operand.vmem [shape: bf16[128,128], index: 3, kind: input, shape index: {}]
  %s4 = inlined_call_operand.vmem [shape: f32[1,128], index: 4, kind: input, shape index: {}]
  %s5 = inlined_call_operand.vmem [shape: bf16[128,128], index: 5, kind: input, shape index: {}]
  %s6 = inlined_call_operand.vmem [shape: f32[1,128], index: 6, kind: input, shape index: {}]
  %s7 = inlined_call_operand.vmem [shape: bf16[128,256], index: 7, kind: input, shape index: {}]
  %s8 = inlined_call_operand.vmem [shape: f32[1,256], index: 8, kind: input, shape index: {}]
  %s9 = inlined_call_operand.vmem [shape: bf16[128,128], index: 9, kind: input, shape index: {}]
  %s10 = inlined_call_operand.vmem [shape: f32[1,128], index: 10, kind: input, shape index: {}]
  %s11 = inlined_call_operand.vmem [shape: bf16[128,128], index: 11, kind: input, shape index: {}]
  %s12 = inlined_call_operand.vmem [shape: f32[1,128], index: 12, kind: input, shape index: {}]
  %s13 = inlined_call_operand.vmem [shape: bf16[128,128], index: 13, kind: input, shape index: {}]
  %s14 = inlined_call_operand.vmem [shape: f32[1,128], index: 14, kind: input, shape index: {}]
  %s15 = inlined_call_operand.vmem [shape: bf16[128,128], index: 15, kind: input, shape index: {}]
  %s16 = inlined_call_operand.vmem [shape: f32[1,128], index: 16, kind: input, shape index: {}]
  %s17 = inlined_call_operand.vmem [shape: bf16[2,16,128], index: 17, kind: output, shape index: {}]
  %s18 = sld [smem:[#allocation0]]
  $region82: #{model_forward.1} parent=0
    _
  %s20 = ssub.s32 1, %s18
  %s21 = scalar_select 0, %s20, %s18
  $region1: #{model_forward.1} parent=0
    #allocation2 [shape = 'u8[401408]{0}', space=vmem, size = 0x62000, scoped, tag = 'input window, operand 1, single buffered']
    #allocation3 [shape = 's32[1]{0}', space=sflag, size = 0x4, scoped, tag = 'scoped memory for model_forward.1']
    %22 = vsyncpa [#allocation3], 0
    // Predicated region
    $region2: #{model_forward.1} parent=1 // pred_check
      _
    $region3: #{model_forward.1} parent=1 // pred_check_branch
      %24 = sbr.rel (0) target = $region5
    $region4: #{model_forward.1} parent=1 // pred_region
      _
    $region5: #{model_forward.1} parent=1 // pred_fallthru
      _
    // Predicated region
    $region6: #{model_forward.1} parent=1 // pred_check
      _
    $region7: #{model_forward.1} parent=1 // pred_check_branch
      %26 = sbr.rel (0) target = $region9
    $region8: #{model_forward.1} parent=1 // pred_region
      %s28 = ssub.s32 12544, 12544
      %29 = vsyncadd [#allocation3], %s28
      %s30 = sshll.u32 [#allocation2], 4
      %s31 = int_to_ptr.vmem [resolvable:$true] %s30
      %36 = dma.hbm_to_vmem [thread:$0]  %s1, 12544, %s31, [#allocation3], 64, 64, 4
    $region9: #{model_forward.1} parent=1 // pred_fallthru
      _
    // Predicated region
    $region10: #{model_forward.1} parent=1 // pred_check
      _
    $region11: #{model_forward.1} parent=1 // pred_check_branch
      %38 = sbr.rel (0) target = $region13
    $region12: #{model_forward.1} parent=1 // pred_region
      _
    $region13: #{model_forward.1} parent=1 // pred_fallthru
      _
    // Predicated region
    $region14: #{model_forward.1} parent=1 // pred_check
      _
    $region15: #{model_forward.1} parent=1 // pred_check_branch
      %40 = sbr.rel (0) target = $region17
    $region16: #{model_forward.1} parent=1 // pred_region
      _
    $region17: #{model_forward.1} parent=1 // pred_fallthru
      _
    // Predicated region
    $region18: #{model_forward.1} parent=1 // pred_check
      _
    $region19: #{model_forward.1} parent=1 // pred_check_branch
      %42 = sbr.rel (0) target = $region21
    $region20: #{model_forward.1} parent=1 // pred_region
      _
    $region21: #{model_forward.1} parent=1 // pred_fallthru
      _
    // Predicated region
    $region22: #{model_forward.1} parent=1 // pred_check
      _
    $region23: #{model_forward.1} parent=1 // pred_check_branch
      %44 = sbr.rel (0) target = $region25
    $region24: #{model_forward.1} parent=1 // pred_region
      _
    $region25: #{model_forward.1} parent=1 // pred_fallthru
      _
    // Predicated region
    $region26: #{model_forward.1} parent=1 // pred_check
      _
    $region27: #{model_forward.1} parent=1 // pred_check_branch
      %46 = sbr.rel (0) target = $region29
    $region28: #{model_forward.1} parent=1 // pred_region
      _
    $region29: #{model_forward.1} parent=1 // pred_fallthru
      _
    // Predicated region
    $region30: #{model_forward.1} parent=1 // pred_check
      _
    $region31: #{model_forward.1} parent=1 // pred_check_branch
      %48 = sbr.rel (0) target = $region33
    $region32: #{model_forward.1} parent=1 // pred_region
      _
    $region33: #{model_forward.1} parent=1 // pred_fallthru
      _
    // Predicated region
    $region34: #{model_forward.1} parent=1 // pred_check
      _
    $region35: #{model_forward.1} parent=1 // pred_check_branch
      %50 = sbr.rel (0) target = $region37
    $region36: #{model_forward.1} parent=1 // pred_region
      _
    $region37: #{model_forward.1} parent=1 // pred_fallthru
      _
    // Predicated region
    $region38: #{model_forward.1} parent=1 // pred_check
      _
    $region39: #{model_forward.1} parent=1 // pred_check_branch
      %52 = sbr.rel (0) target = $region41
    $region40: #{model_forward.1} parent=1 // pred_region
      _
    $region41: #{model_forward.1} parent=1 // pred_fallthru
      _
    // Predicated region
    $region42: #{model_forward.1} parent=1 // pred_check
      _
    $region43: #{model_forward.1} parent=1 // pred_check_branch
      %54 = sbr.rel (0) target = $region45
    $region44: #{model_forward.1} parent=1 // pred_region
      _
    $region45: #{model_forward.1} parent=1 // pred_fallthru
      _
    // Predicated region
    $region46: #{model_forward.1} parent=1 // pred_check
      _
    $region47: #{model_forward.1} parent=1 // pred_check_branch
      %56 = sbr.rel (0) target = $region49
    $region48: #{model_forward.1} parent=1 // pred_region
      _
    $region49: #{model_forward.1} parent=1 // pred_fallthru
      _
    // Predicated region
    $region50: #{model_forward.1} parent=1 // pred_check
      _
    $region51: #{model_forward.1} parent=1 // pred_check_branch
      %58 = sbr.rel (0) target = $region53
    $region52: #{model_forward.1} parent=1 // pred_region
      _
    $region53: #{model_forward.1} parent=1 // pred_fallthru
      _
    // Predicated region
    $region54: #{model_forward.1} parent=1 // pred_check
      _
    $region55: #{model_forward.1} parent=1 // pred_check_branch
      %60 = sbr.rel (0) target = $region57
    $region56: #{model_forward.1} parent=1 // pred_region
      _
    $region57: #{model_forward.1} parent=1 // pred_fallthru
      _
    // Predicated region
    $region58: #{model_forward.1} parent=1 // pred_check
      _
    $region59: #{model_forward.1} parent=1 // pred_check_branch
      %62 = sbr.rel (0) target = $region61
    $region60: #{model_forward.1} parent=1 // pred_region
      _
    $region61: #{model_forward.1} parent=1 // pred_fallthru
      _
    // Predicated region
    $region62: #{model_forward.1} parent=1 // pred_check
      _
    $region63: #{model_forward.1} parent=1 // pred_check_branch
      %64 = sbr.rel (0) target = $region65
    $region64: #{model_forward.1} parent=1 // pred_region
      _
    $region65: #{model_forward.1} parent=1 // pred_fallthru
      _
    // Predicated region
    $region66: #{model_forward.1} parent=1 // pred_check
      _
    $region67: #{model_forward.1} parent=1 // pred_check_branch
      %66 = sbr.rel (0) target = $region69
    $region68: #{model_forward.1} parent=1 // pred_region
      _
    $region69: #{model_forward.1} parent=1 // pred_fallthru
      _
    // Predicated region
    $region70: #{model_forward.1} parent=1 // pred_check
      _
    $region71: #{model_forward.1} parent=1 // pred_check_branch
      %68 = sbr.rel (0) target = $region73
    $region72: #{model_forward.1} parent=1 // pred_region
      %69 = dma.done [#allocation3], 12544
    $region73: #{model_forward.1} parent=1 // pred_fallthru
      _
    %v71 = vld [vmem:[%s0] sm:$0xff]
    %v72 = vld [vmem:[%s0 + $0x8] sm:$0xff]
    %v73 = vld [vmem:[%s0 + $0x10] sm:$0xff]
    %v74 = vld [vmem:[%s0 + $0x18] sm:$0xff]
    %v75 = vld [vmem:[%s0 + $0x20] sm:$0xff]
    %v76 = vld [vmem:[%s0 + $0x28] sm:$0xff]
    %v77 = vld [vmem:[%s0 + $0x30] sm:$0xff]
    %v78 = vld [vmem:[%s0 + $0x38] sm:$0xff]
    %v79 = vld [vmem:[%s0 + $0x40] sm:$0xff]
    %v80 = vld [vmem:[%s0 + $0x48] sm:$0xff]
    %v81 = vld [vmem:[%s0 + $0x50] sm:$0xff]
    %v82 = vld [vmem:[%s0 + $0x58] sm:$0xff]
    %v83 = vld [vmem:[%s0 + $0x60] sm:$0xff]
    %v84 = vld [vmem:[%s0 + $0x68] sm:$0xff]
    %v85 = vld [vmem:[%s0 + $0x70] sm:$0xff]
    %v86 = vld [vmem:[%s0 + $0x78] sm:$0xff]
    %v87 = vld [vmem:[%s0 + $0x80] sm:$0xff]
    %v88 = vld [vmem:[%s0 + $0x88] sm:$0xff]
    %v89 = vld [vmem:[%s0 + $0x90] sm:$0xff]
    %v90 = vld [vmem:[%s0 + $0x98] sm:$0xff]
    %v91 = vld [vmem:[%s0 + $0xa0] sm:$0xff]
    %v92 = vld [vmem:[%s0 + $0xa8] sm:$0xff]
    %v93 = vld [vmem:[%s0 + $0xb0] sm:$0xff]
    %v94 = vld [vmem:[%s0 + $0xb8] sm:$0xff]
    %v95 = vld [vmem:[%s0 + $0xc0] sm:$0xff]
    %v96 = vld [vmem:[%s0 + $0xc8] sm:$0xff]
    %v97 = vpack.c.bf16 %v84, %v71
    %v98 = vpack.c.bf16 %v85, %v72
    %v99 = vpack.c.bf16 %v86, %v73
    %v100 = vpack.c.bf16 %v87, %v74
    %v101 = vpack.c.bf16 %v88, %v75
    %v102 = vpack.c.bf16 %v89, %v76
    %v103 = vpack.c.bf16 %v90, %v77
    %v104 = vpack.c.bf16 %v91, %v78
    %v105 = vpack.c.bf16 %v92, %v79
    %v106 = vpack.c.bf16 %v93, %v80
    %v107 = vpack.c.bf16 %v94, %v81
    %v108 = vpack.c.bf16 %v95, %v82
    %v109 = vpack.c.bf16 %v96, %v83
    %v110 = vld [vmem:[#allocation2] sm:$0xf]
    %v111 = vld [vmem:[#allocation2 + $0x4] sm:$0xf]
    %v112 = vld [vmem:[#allocation2 + $0x8] sm:$0xf]
    %v113 = vld [vmem:[#allocation2 + $0xc] sm:$0xf]
    %v114 = vld [vmem:[#allocation2 + $0x10] sm:$0xf]
    %v115 = vld [vmem:[#allocation2 + $0x14] sm:$0xf]
    %v116 = vld [vmem:[#allocation2 + $0x18] sm:$0xf]
    %v117 = vld [vmem:[#allocation2 + $0x1c] sm:$0xf]
    %v118 = vld [vmem:[#allocation2 + $0x20] sm:$0xf]
    %v119 = vld [vmem:[#allocation2 + $0x24] sm:$0xf]
    %v120 = vld [vmem:[#allocation2 + $0x28] sm:$0xf]
    %v121 = vld [vmem:[#allocation2 + $0x2c] sm:$0xf]
    %v122 = vld [vmem:[#allocation2 + $0x30] sm:$0xf]
    %v123 = vld [vmem:[#allocation2 + $0x34] sm:$0xf]
    %v124 = vld [vmem:[#allocation2 + $0x38] sm:$0xf]
    %v125 = vld [vmem:[#allocation2 + $0x3c] sm:$0xf]
    %v126 = vld [vmem:[#allocation2 + $0x40] sm:$0xf]
    %v127 = vld [vmem:[#allocation2 + $0x44] sm:$0xf]
    %v128 = vld [vmem:[#allocation2 + $0x48] sm:$0xf]
    %v129 = vld [vmem:[#allocation2 + $0x4c] sm:$0xf]
    %v130 = vld [vmem:[#allocation2 + $0x50] sm:$0xf]
    %v131 = vld [vmem:[#allocation2 + $0x54] sm:$0xf]
    %v132 = vld [vmem:[#allocation2 + $0x58] sm:$0xf]
    %v133 = vld [vmem:[#allocation2 + $0x5c] sm:$0xf]
    %v134 = vld [vmem:[#allocation2 + $0x60] sm:$0xf]
    %v135 = vld [vmem:[#allocation2 + $0x64] sm:$0xf]
    %v136 = vld [vmem:[#allocation2 + $0x68] sm:$0xf]
    %v137 = vld [vmem:[#allocation2 + $0x6c] sm:$0xf]
    %v138 = vld [vmem:[#allocation2 + $0x70] sm:$0xf]
    %v139 = vld [vmem:[#allocation2 + $0x74] sm:$0xf]
    %v140 = vld [vmem:[#allocation2 + $0x78] sm:$0xf]
    %v141 = vld [vmem:[#allocation2 + $0x7c] sm:$0xf]
    %v142 = vld [vmem:[#allocation2 + $0x80] sm:$0xf]
    %v143 = vld [vmem:[#allocation2 + $0x84] sm:$0xf]
    %v144 = vld [vmem:[#allocation2 + $0x88] sm:$0xf]
    %v145 = vld [vmem:[#allocation2 + $0x8c] sm:$0xf]
    %v146 = vld [vmem:[#allocation2 + $0x90] sm:$0xf]
    %v147 = vld [vmem:[#allocation2 + $0x94] sm:$0xf]
    %v148 = vld [vmem:[#allocation2 + $0x98] sm:$0xf]
    %v149 = vld [vmem:[#allocation2 + $0x9c] sm:$0xf]
    %v150 = vld [vmem:[#allocation2 + $0xa0] sm:$0xf]
    %v151 = vld [vmem:[#allocation2 + $0xa4] sm:$0xf]
    %v152 = vld [vmem:[#allocation2 + $0xa8] sm:$0xf]
    %v153 = vld [vmem:[#allocation2 + $0xac] sm:$0xf]
    %v154 = vld [vmem:[#allocation2 + $0xb0] sm:$0xf]
    %v155 = vld [vmem:[#allocation2 + $0xb4] sm:$0xf]
    %v156 = vld [vmem:[#allocation2 + $0xb8] sm:$0xf]
    %v157 = vld [vmem:[#allocation2 + $0xbc] sm:$0xf]
    %v158 = vld [vmem:[#allocation2 + $0xc0] sm:$0xf]
    %v159 = vld [vmem:[#allocation2 + $0xc4] sm:$0xf]
    %v160 = vld [vmem:[#allocation2 + $0xc8] sm:$0xf]
    %v161 = vld [vmem:[#allocation2 + $0xcc] sm:$0xf]
    %v162 = vld [vmem:[#allocation2 + $0xd0] sm:$0xf]
    %v163 = vld [vmem:[#allocation2 + $0xd4] sm:$0xf]
    %v164 = vld [vmem:[#allocation2 + $0xd8] sm:$0xf]
    %v165 = vld [vmem:[#allocation2 + $0xdc] sm:$0xf]
    %v166 = vld [vmem:[#allocation2 + $0xe0] sm:$0xf]
    %v167 = vld [vmem:[#allocation2 + $0xe4] sm:$0xf]
    %v168 = vld [vmem:[#allocation2 + $0xe8] sm:$0xf]
    %v169 = vld [vmem:[#allocation2 + $0xec] sm:$0xf]
    %v170 = vld [vmem:[#allocation2 + $0xf0] sm:$0xf]
    %v171 = vld [vmem:[#allocation2 + $0xf4] sm:$0xf]
    %v172 = vld [vmem:[#allocation2 + $0xf8] sm:$0xf]
    %v173 = vld [vmem:[#allocation2 + $0xfc] sm:$0xf]
    %v174 = vld [vmem:[#allocation2 + $0x100] sm:$0xf]
    %v175 = vld [vmem:[#allocation2 + $0x104] sm:$0xf]
    %v176 = vld [vmem:[#allocation2 + $0x108] sm:$0xf]
    %v177 = vld [vmem:[#allocation2 + $0x10c] sm:$0xf]
    %v178 = vld [vmem:[#allocation2 + $0x110] sm:$0xf]
    %v179 = vld [vmem:[#allocation2 + $0x114] sm:$0xf]
    %v180 = vld [vmem:[#allocation2 + $0x118] sm:$0xf]
    %v181 = vld [vmem:[#allocation2 + $0x11c] sm:$0xf]
    %v182 = vld [vmem:[#allocation2 + $0x120] sm:$0xf]
    %v183 = vld [vmem:[#allocation2 + $0x124] sm:$0xf]
    %v184 = vld [vmem:[#allocation2 + $0x128] sm:$0xf]
    %v185 = vld [vmem:[#allocation2 + $0x12c] sm:$0xf]
    %v186 = vld [vmem:[#allocation2 + $0x130] sm:$0xf]
    %v187 = vld [vmem:[#allocation2 + $0x134] sm:$0xf]
    %v188 = vld [vmem:[#allocation2 + $0x138] sm:$0xf]
    %v189 = vld [vmem:[#allocation2 + $0x13c] sm:$0xf]
    %v190 = vld [vmem:[#allocation2 + $0x140] sm:$0xf]
    %v191 = vld [vmem:[#allocation2 + $0x144] sm:$0xf]
    %v192 = vld [vmem:[#allocation2 + $0x148] sm:$0xf]
    %v193 = vld [vmem:[#allocation2 + $0x14c] sm:$0xf]
    %v194 = vld [vmem:[#allocation2 + $0x150] sm:$0xf]
    %v195 = vld [vmem:[#allocation2 + $0x154] sm:$0xf]
    %v196 = vld [vmem:[#allocation2 + $0x158] sm:$0xf]
    %v197 = vld [vmem:[#allocation2 + $0x15c] sm:$0xf]
    %v198 = vld [vmem:[#allocation2 + $0x160] sm:$0xf]
    %v199 = vld [vmem:[#allocation2 + $0x164] sm:$0xf]
    %v200 = vld [vmem:[#allocation2 + $0x168] sm:$0xf]
    %v201 = vld [vmem:[#allocation2 + $0x16c] sm:$0xf]
    %v202 = vld [vmem:[#allocation2 + $0x170] sm:$0xf]
    %v203 = vld [vmem:[#allocation2 + $0x174] sm:$0xf]
    %v204 = vld [vmem:[#allocation2 + $0x178] sm:$0xf]
    %v205 = vld [vmem:[#allocation2 + $0x17c] sm:$0xf]
    %v206 = vld [vmem:[#allocation2 + $0x180] sm:$0xf]
    %v207 = vld [vmem:[#allocation2 + $0x184] sm:$0xf]
    %v208 = vld [vmem:[#allocation2 + $0x188] sm:$0xf]
    %v209 = vld [vmem:[#allocation2 + $0x18c] sm:$0xf]
    %v210 = vld [vmem:[#allocation2 + $0x190] sm:$0xf]
    %v211 = vld [vmem:[#allocation2 + $0x194] sm:$0xf]
    %v212 = vld [vmem:[#allocation2 + $0x198] sm:$0xf]
    %v213 = vld [vmem:[#allocation2 + $0x19c] sm:$0xf]
    %v214 = vld [vmem:[#allocation2 + $0x1a0] sm:$0xf]
    %v215 = vld [vmem:[#allocation2 + $0x1a4] sm:$0xf]
    %v216 = vld [vmem:[#allocation2 + $0x1a8] sm:$0xf]
    %v217 = vld [vmem:[#allocation2 + $0x1ac] sm:$0xf]
    %v218 = vld [vmem:[#allocation2 + $0x1b0] sm:$0xf]
    %v219 = vld [vmem:[#allocation2 + $0x1b4] sm:$0xf]
    %v220 = vld [vmem:[#allocation2 + $0x1b8] sm:$0xf]
    %v221 = vld [vmem:[#allocation2 + $0x1bc] sm:$0xf]
    %v222 = vld [vmem:[#allocation2 + $0x1c0] sm:$0xf]
    %v223 = vld [vmem:[#allocation2 + $0x1c4] sm:$0xf]
    %v224 = vld [vmem:[#allocation2 + $0x1c8] sm:$0xf]
    %v225 = vld [vmem:[#allocation2 + $0x1cc] sm:$0xf]
    %v226 = vld [vmem:[#allocation2 + $0x1d0] sm:$0xf]
    %v227 = vld [vmem:[#allocation2 + $0x1d4] sm:$0xf]
    %v228 = vld [vmem:[#allocation2 + $0x1d8] sm:$0xf]
    %v229 = vld [vmem:[#allocation2 + $0x1dc] sm:$0xf]
    %v230 = vld [vmem:[#allocation2 + $0x1e0] sm:$0xf]
    %v231 = vld [vmem:[#allocation2 + $0x1e4] sm:$0xf]
    %v232 = vld [vmem:[#allocation2 + $0x1e8] sm:$0xf]
    %v233 = vld [vmem:[#allocation2 + $0x1ec] sm:$0xf]
    %v234 = vld [vmem:[#allocation2 + $0x1f0] sm:$0xf]
    %v235 = vld [vmem:[#allocation2 + $0x1f4] sm:$0xf]
    %v236 = vld [vmem:[#allocation2 + $0x1f8] sm:$0xf]
    %v237 = vld [vmem:[#allocation2 + $0x1fc] sm:$0xf]
    %v238 = vld [vmem:[#allocation2 + $0x200] sm:$0xf]
    %v239 = vld [vmem:[#allocation2 + $0x204] sm:$0xf]
    %v240 = vld [vmem:[#allocation2 + $0x208] sm:$0xf]
    %v241 = vld [vmem:[#allocation2 + $0x20c] sm:$0xf]
    %v242 = vld [vmem:[#allocation2 + $0x210] sm:$0xf]
    %v243 = vld [vmem:[#allocation2 + $0x214] sm:$0xf]
    %v244 = vld [vmem:[#allocation2 + $0x218] sm:$0xf]
    %v245 = vld [vmem:[#allocation2 + $0x21c] sm:$0xf]
    %v246 = vld [vmem:[#allocation2 + $0x220] sm:$0xf]
    %v247 = vld [vmem:[#allocation2 + $0x224] sm:$0xf]
    %v248 = vld [vmem:[#allocation2 + $0x228] sm:$0xf]
    %v249 = vld [vmem:[#allocation2 + $0x22c] sm:$0xf]
    %v250 = vld [vmem:[#allocation2 + $0x230] sm:$0xf]
    %v251 = vld [vmem:[#allocation2 + $0x234] sm:$0xf]
    %v252 = vld [vmem:[#allocation2 + $0x238] sm:$0xf]
    %v253 = vld [vmem:[#allocation2 + $0x23c] sm:$0xf]
    %v254 = vld [vmem:[#allocation2 + $0x240] sm:$0xf]
    %v255 = vld [vmem:[#allocation2 + $0x244] sm:$0xf]
    %v256 = vld [vmem:[#allocation2 + $0x248] sm:$0xf]
    %v257 = vld [vmem:[#allocation2 + $0x24c] sm:$0xf]
    %v258 = vld [vmem:[#allocation2 + $0x250] sm:$0xf]
    %v259 = vld [vmem:[#allocation2 + $0x254] sm:$0xf]
    %v260 = vld [vmem:[#allocation2 + $0x258] sm:$0xf]
    %v261 = vld [vmem:[#allocation2 + $0x25c] sm:$0xf]
    %v262 = vld [vmem:[#allocation2 + $0x260] sm:$0xf]
    %v263 = vld [vmem:[#allocation2 + $0x264] sm:$0xf]
    %v264 = vld [vmem:[#allocation2 + $0x268] sm:$0xf]
    %v265 = vld [vmem:[#allocation2 + $0x26c] sm:$0xf]
    %v266 = vld [vmem:[#allocation2 + $0x270] sm:$0xf]
    %v267 = vld [vmem:[#allocation2 + $0x274] sm:$0xf]
    %v268 = vld [vmem:[#allocation2 + $0x278] sm:$0xf]
    %v269 = vld [vmem:[#allocation2 + $0x27c] sm:$0xf]
    %v270 = vld [vmem:[#allocation2 + $0x280] sm:$0xf]
    %v271 = vld [vmem:[#allocation2 + $0x284] sm:$0xf]
    %v272 = vld [vmem:[#allocation2 + $0x288] sm:$0xf]
    %v273 = vld [vmem:[#allocation2 + $0x28c] sm:$0xf]
    %v274 = vld [vmem:[#allocation2 + $0x290] sm:$0xf]
    %v275 = vld [vmem:[#allocation2 + $0x294] sm:$0xf]
    %v276 = vld [vmem:[#allocation2 + $0x298] sm:$0xf]
    %v277 = vld [vmem:[#allocation2 + $0x29c] sm:$0xf]
    %v278 = vld [vmem:[#allocation2 + $0x2a0] sm:$0xf]
    %v279 = vld [vmem:[#allocation2 + $0x2a4] sm:$0xf]
    %v280 = vld [vmem:[#allocation2 + $0x2a8] sm:$0xf]
    %v281 = vld [vmem:[#allocation2 + $0x2ac] sm:$0xf]
    %v282 = vld [vmem:[#allocation2 + $0x2b0] sm:$0xf]
    %v283 = vld [vmem:[#allocation2 + $0x2b4] sm:$0xf]
    %v284 = vld [vmem:[#allocation2 + $0x2b8] sm:$0xf]
    %v285 = vld [vmem:[#allocation2 + $0x2bc] sm:$0xf]
    %v286 = vld [vmem:[#allocation2 + $0x2c0] sm:$0xf]
    %v287 = vld [vmem:[#allocation2 + $0x2c4] sm:$0xf]
    %v288 = vld [vmem:[#allocation2 + $0x2c8] sm:$0xf]
    %v289 = vld [vmem:[#allocation2 + $0x2cc] sm:$0xf]
    %v290 = vld [vmem:[#allocation2 + $0x2d0] sm:$0xf]
    %v291 = vld [vmem:[#allocation2 + $0x2d4] sm:$0xf]
    %v292 = vld [vmem:[#allocation2 + $0x2d8] sm:$0xf]
    %v293 = vld [vmem:[#allocation2 + $0x2dc] sm:$0xf]
    %v294 = vld [vmem:[#allocation2 + $0x2e0] sm:$0xf]
    %v295 = vld [vmem:[#allocation2 + $0x2e4] sm:$0xf]
    %v296 = vld [vmem:[#allocation2 + $0x2e8] sm:$0xf]
    %v297 = vld [vmem:[#allocation2 + $0x2ec] sm:$0xf]
    %v298 = vld [vmem:[#allocation2 + $0x2f0] sm:$0xf]
    %v299 = vld [vmem:[#allocation2 + $0x2f4] sm:$0xf]
    %v300 = vld [vmem:[#allocation2 + $0x2f8] sm:$0xf]
    %v301 = vld [vmem:[#allocation2 + $0x2fc] sm:$0xf]
    %v302 = vld [vmem:[#allocation2 + $0x300] sm:$0xf]
    %v303 = vld [vmem:[#allocation2 + $0x304] sm:$0xf]
    %v304 = vld [vmem:[#allocation2 + $0x308] sm:$0xf]
    %v305 = vld [vmem:[#allocation2 + $0x30c] sm:$0xf]
    %v306 = vld [vmem:[%s2] sm:$0x1]
    %v308 = vlaneseq
    %v309 = vshrl.u32 %v308, 7
    %v310 = vsub.s32 0, %v309
    %v311 = vrot.slane %v306, %v310
    %v509 = vunpack.c.l.b16 %v110
    %v510 = vunpack.c.l.b16 %v111
    %v511 = vunpack.c.l.b16 %v112
    %v512 = vunpack.c.l.b16 %v113
    %v513 = vunpack.c.l.b16 %v114
    %v514 = vunpack.c.l.b16 %v115
    %v515 = vunpack.c.l.b16 %v116
    %v516 = vunpack.c.l.b16 %v117
    %v517 = vunpack.c.l.b16 %v118
    %v518 = vunpack.c.l.b16 %v119
    %v519 = vunpack.c.l.b16 %v120
    %v520 = vunpack.c.l.b16 %v121
    %v521 = vunpack.c.l.b16 %v122
    %v522 = vunpack.c.l.b16 %v123
    %v523 = vunpack.c.l.b16 %v124
    %v524 = vunpack.c.l.b16 %v125
    %v525 = vunpack.c.l.b16 %v126
    %v526 = vunpack.c.l.b16 %v127
    %v527 = vunpack.c.l.b16 %v128
    %v528 = vunpack.c.l.b16 %v129
    %v529 = vunpack.c.l.b16 %v130
    %v530 = vunpack.c.l.b16 %v131
    %v531 = vunpack.c.l.b16 %v132
    %v532 = vunpack.c.l.b16 %v133
    %v533 = vunpack.c.l.b16 %v134
    %v534 = vunpack.c.l.b16 %v135
    %v535 = vunpack.c.l.b16 %v136
    %v536 = vunpack.c.l.b16 %v137
    %v537 = vunpack.c.l.b16 %v138
    %v538 = vunpack.c.l.b16 %v139
    %v539 = vunpack.c.l.b16 %v140
    %v540 = vunpack.c.l.b16 %v141
    %v541 = vunpack.c.l.b16 %v142
    %v542 = vunpack.c.l.b16 %v143
    %v543 = vunpack.c.l.b16 %v144
    %v544 = vunpack.c.l.b16 %v145
    %v545 = vunpack.c.l.b16 %v146
    %v546 = vunpack.c.l.b16 %v147
    %v547 = vunpack.c.l.b16 %v148
    %v548 = vunpack.c.l.b16 %v149
    %v549 = vunpack.c.l.b16 %v150
    %v550 = vunpack.c.l.b16 %v151
    %v551 = vunpack.c.l.b16 %v152
    %v552 = vunpack.c.l.b16 %v153
    %v553 = vunpack.c.l.b16 %v154
    %v554 = vunpack.c.l.b16 %v155
    %v555 = vunpack.c.l.b16 %v156
    %v556 = vunpack.c.l.b16 %v157
    %v557 = vunpack.c.l.b16 %v158
    %v558 = vunpack.c.l.b16 %v159
    %v559 = vunpack.c.l.b16 %v160
    %v560 = vunpack.c.l.b16 %v161
    %v561 = vunpack.c.l.b16 %v162
    %v562 = vunpack.c.l.b16 %v163
    %v563 = vunpack.c.l.b16 %v164
    %v564 = vunpack.c.l.b16 %v165
    %v565 = vunpack.c.l.b16 %v166
    %v566 = vunpack.c.l.b16 %v167
    %v567 = vunpack.c.l.b16 %v168
    %v568 = vunpack.c.l.b16 %v169
    %v569 = vunpack.c.l.b16 %v170
    %v570 = vunpack.c.l.b16 %v171
    %v571 = vunpack.c.l.b16 %v172
    %v572 = vunpack.c.l.b16 %v173
    %v573 = vunpack.c.l.b16 %v174
    %v574 = vunpack.c.l.b16 %v175
    %v575 = vunpack.c.l.b16 %v176
    %v576 = vunpack.c.l.b16 %v177
    %v577 = vunpack.c.l.b16 %v178
    %v578 = vunpack.c.l.b16 %v179
    %v579 = vunpack.c.l.b16 %v180
    %v580 = vunpack.c.l.b16 %v181
    %v581 = vunpack.c.l.b16 %v182
    %v582 = vunpack.c.l.b16 %v183
    %v583 = vunpack.c.l.b16 %v184
    %v584 = vunpack.c.l.b16 %v185
    %v585 = vunpack.c.l.b16 %v186
    %v586 = vunpack.c.l.b16 %v187
    %v587 = vunpack.c.l.b16 %v188
    %v588 = vunpack.c.l.b16 %v189
    %v589 = vunpack.c.l.b16 %v190
    %v590 = vunpack.c.l.b16 %v191
    %v591 = vunpack.c.l.b16 %v192
    %v592 = vunpack.c.l.b16 %v193
    %v593 = vunpack.c.l.b16 %v194
    %v594 = vunpack.c.l.b16 %v195
    %v595 = vunpack.c.l.b16 %v196
    %v596 = vunpack.c.l.b16 %v197
    %v597 = vunpack.c.l.b16 %v198
    %v598 = vunpack.c.l.b16 %v199
    %v599 = vunpack.c.l.b16 %v200
    %v600 = vunpack.c.l.b16 %v201
    %v601 = vunpack.c.l.b16 %v202
    %v602 = vunpack.c.l.b16 %v203
    %v603 = vunpack.c.l.b16 %v204
    %v604 = vunpack.c.l.b16 %v205
    %v605 = vunpack.c.l.b16 %v206
    %v606 = vunpack.c.l.b16 %v207
    %v607 = vunpack.c.l.b16 %v208
    %v608 = vunpack.c.l.b16 %v209
    %v609 = vunpack.c.l.b16 %v210
    %v610 = vunpack.c.l.b16 %v211
    %v611 = vunpack.c.l.b16 %v212
    %v612 = vunpack.c.l.b16 %v213
    %v613 = vunpack.c.l.b16 %v214
    %v614 = vunpack.c.l.b16 %v215
    %v615 = vunpack.c.l.b16 %v216
    %v616 = vunpack.c.l.b16 %v217
    %v617 = vunpack.c.l.b16 %v218
    %v618 = vunpack.c.l.b16 %v219
    %v619 = vunpack.c.l.b16 %v220
    %v620 = vunpack.c.l.b16 %v221
    %v621 = vunpack.c.l.b16 %v222
    %v622 = vunpack.c.l.b16 %v223
    %v623 = vunpack.c.l.b16 %v224
    %v624 = vunpack.c.l.b16 %v225
    %v625 = vunpack.c.l.b16 %v226
    %v626 = vunpack.c.l.b16 %v227
    %v627 = vunpack.c.l.b16 %v228
    %v628 = vunpack.c.l.b16 %v229
    %v629 = vunpack.c.l.b16 %v230
    %v630 = vunpack.c.l.b16 %v231
    %v631 = vunpack.c.l.b16 %v232
    %v632 = vunpack.c.l.b16 %v233
    %v633 = vunpack.c.l.b16 %v234
    %v634 = vunpack.c.l.b16 %v235
    %v635 = vunpack.c.l.b16 %v236
    %v636 = vunpack.c.l.b16 %v237
    %v637 = vunpack.c.l.b16 %v238
    %v638 = vunpack.c.l.b16 %v239
    %v639 = vunpack.c.l.b16 %v240
    %v640 = vunpack.c.l.b16 %v241
    %v641 = vunpack.c.l.b16 %v242
    %v642 = vunpack.c.l.b16 %v243
    %v643 = vunpack.c.l.b16 %v244
    %v644 = vunpack.c.l.b16 %v245
    %v645 = vunpack.c.l.b16 %v246
    %v646 = vunpack.c.l.b16 %v247
    %v647 = vunpack.c.l.b16 %v248
    %v648 = vunpack.c.l.b16 %v249
    %v649 = vunpack.c.l.b16 %v250
    %v650 = vunpack.c.l.b16 %v251
    %v651 = vunpack.c.l.b16 %v252
    %v652 = vunpack.c.l.b16 %v253
    %v653 = vunpack.c.l.b16 %v254
    %v654 = vunpack.c.l.b16 %v255
    %v655 = vunpack.c.l.b16 %v256
    %v656 = vunpack.c.l.b16 %v257
    %v657 = vunpack.c.l.b16 %v258
    %v658 = vunpack.c.l.b16 %v259
    %v659 = vunpack.c.l.b16 %v260
    %v660 = vunpack.c.l.b16 %v261
    %v661 = vunpack.c.l.b16 %v262
    %v662 = vunpack.c.l.b16 %v263
    %v663 = vunpack.c.l.b16 %v264
    %v664 = vunpack.c.l.b16 %v265
    %v665 = vunpack.c.l.b16 %v266
    %v666 = vunpack.c.l.b16 %v267
    %v667 = vunpack.c.l.b16 %v268
    %v668 = vunpack.c.l.b16 %v269
    %v669 = vunpack.c.l.b16 %v270
    %v670 = vunpack.c.l.b16 %v271
    %v671 = vunpack.c.l.b16 %v272
    %v672 = vunpack.c.l.b16 %v273
    %v673 = vunpack.c.l.b16 %v274
    %v674 = vunpack.c.l.b16 %v275
    %v675 = vunpack.c.l.b16 %v276
    %v676 = vunpack.c.l.b16 %v277
    %v677 = vunpack.c.l.b16 %v278
    %v678 = vunpack.c.l.b16 %v279
    %v679 = vunpack.c.l.b16 %v280
    %v680 = vunpack.c.l.b16 %v281
    %v681 = vunpack.c.l.b16 %v282
    %v682 = vunpack.c.l.b16 %v283
    %v683 = vunpack.c.l.b16 %v284
    %v684 = vunpack.c.l.b16 %v285
    %v685 = vunpack.c.l.b16 %v286
    %v686 = vunpack.c.l.b16 %v287
    %v687 = vunpack.c.l.b16 %v288
    %v688 = vunpack.c.l.b16 %v289
    %v689 = vunpack.c.l.b16 %v290
    %v690 = vunpack.c.l.b16 %v291
    %v691 = vunpack.c.l.b16 %v292
    %v692 = vunpack.c.l.b16 %v293
    %v693 = vunpack.c.l.b16 %v294
    %v694 = vunpack.c.l.b16 %v295
    %v695 = vunpack.c.l.b16 %v296
    %v696 = vunpack.c.l.b16 %v297
    %v697 = vunpack.c.l.b16 %v298
    %v698 = vunpack.c.l.b16 %v299
    %v699 = vunpack.c.l.b16 %v300
    %v700 = vunpack.c.l.b16 %v301
    %v701 = vunpack.c.l.b16 %v302
    %v702 = vunpack.c.l.b16 %v303
    %v703 = vunpack.c.l.b16 %v304
    %v704 = vunpack.c.l.b16 %v305
    %v705 = vpack.c.b16 %v510, %v509
    %v706 = vpack.c.b16 %v512, %v511
    %v707 = vpack.c.b16 %v514, %v513
    %v708 = vpack.c.b16 %v516, %v515
    %v709 = vpack.c.b16 %v518, %v517
    %v710 = vpack.c.b16 %v520, %v519
    %v711 = vpack.c.b16 %v522, %v521
    %v712 = vpack.c.b16 %v524, %v523
    %v713 = vpack.c.b16 %v526, %v525
    %v714 = vpack.c.b16 %v528, %v527
    %v715 = vpack.c.b16 %v530, %v529
    %v716 = vpack.c.b16 %v532, %v531
    %v717 = vpack.c.b16 %v534, %v533
    %v718 = vpack.c.b16 %v536, %v535
    %v719 = vpack.c.b16 %v538, %v537
    %v720 = vpack.c.b16 %v540, %v539
    %v721 = vpack.c.b16 %v542, %v541
    %v722 = vpack.c.b16 %v544, %v543
    %v723 = vpack.c.b16 %v546, %v545
    %v724 = vpack.c.b16 %v548, %v547
    %v725 = vpack.c.b16 %v550, %v549
    %v726 = vpack.c.b16 %v552, %v551
    %v727 = vpack.c.b16 %v554, %v553
    %v728 = vpack.c.b16 %v556, %v555
    %v729 = vpack.c.b16 %v558, %v557
    %v730 = vpack.c.b16 %v560, %v559
    %v731 = vpack.c.b16 %v562, %v561
    %v732 = vpack.c.b16 %v564, %v563
    %v733 = vpack.c.b16 %v566, %v565
    %v734 = vpack.c.b16 %v568, %v567
    %v735 = vpack.c.b16 %v570, %v569
    %v736 = vpack.c.b16 %v572, %v571
    %v737 = vpack.c.b16 %v574, %v573
    %v738 = vpack.c.b16 %v576, %v575
    %v739 = vpack.c.b16 %v578, %v577
    %v740 = vpack.c.b16 %v580, %v579
    %v741 = vpack.c.b16 %v582, %v581
    %v742 = vpack.c.b16 %v584, %v583
    %v743 = vpack.c.b16 %v586, %v585
    %v744 = vpack.c.b16 %v588, %v587
    %v745 = vpack.c.b16 %v590, %v589
    %v746 = vpack.c.b16 %v592, %v591
    %v747 = vpack.c.b16 %v594, %v593
    %v748 = vpack.c.b16 %v596, %v595
    %v749 = vpack.c.b16 %v598, %v597
    %v750 = vpack.c.b16 %v600, %v599
    %v751 = vpack.c.b16 %v602, %v601
    %v752 = vpack.c.b16 %v604, %v603
    %v753 = vpack.c.b16 %v606, %v605
    %v754 = vpack.c.b16 %v608, %v607
    %v755 = vpack.c.b16 %v610, %v609
    %v756 = vpack.c.b16 %v612, %v611
    %v757 = vpack.c.b16 %v614, %v613
    %v758 = vpack.c.b16 %v616, %v615
    %v759 = vpack.c.b16 %v618, %v617
    %v760 = vpack.c.b16 %v620, %v619
    %v761 = vpack.c.b16 %v622, %v621
    %v762 = vpack.c.b16 %v624, %v623
    %v763 = vpack.c.b16 %v626, %v625
    %v764 = vpack.c.b16 %v628, %v627
    %v765 = vpack.c.b16 %v630, %v629
    %v766 = vpack.c.b16 %v632, %v631
    %v767 = vpack.c.b16 %v634, %v633
    %v768 = vpack.c.b16 %v636, %v635
    %v769 = vpack.c.b16 %v638, %v637
    %v770 = vpack.c.b16 %v640, %v639
    %v771 = vpack.c.b16 %v642, %v641
    %v772 = vpack.c.b16 %v644, %v643
    %v773 = vpack.c.b16 %v646, %v645
    %v774 = vpack.c.b16 %v648, %v647
    %v775 = vpack.c.b16 %v650, %v649
    %v776 = vpack.c.b16 %v652, %v651
    %v777 = vpack.c.b16 %v654, %v653
    %v778 = vpack.c.b16 %v656, %v655
    %v779 = vpack.c.b16 %v658, %v657
    %v780 = vpack.c.b16 %v660, %v659
    %v781 = vpack.c.b16 %v662, %v661
    %v782 = vpack.c.b16 %v664, %v663
    %v783 = vpack.c.b16 %v666, %v665
    %v784 = vpack.c.b16 %v668, %v667
    %v785 = vpack.c.b16 %v670, %v669
    %v786 = vpack.c.b16 %v672, %v671
    %v787 = vpack.c.b16 %v674, %v673
    %v788 = vpack.c.b16 %v676, %v675
    %v789 = vpack.c.b16 %v678, %v677
    %v790 = vpack.c.b16 %v680, %v679
    %v791 = vpack.c.b16 %v682, %v681
    %v792 = vpack.c.b16 %v684, %v683
    %v793 = vpack.c.b16 %v686, %v685
    %v794 = vpack.c.b16 %v688, %v687
    %v795 = vpack.c.b16 %v690, %v689
    %v796 = vpack.c.b16 %v692, %v691
    %v797 = vpack.c.b16 %v694, %v693
    %v798 = vpack.c.b16 %v696, %v695
    %v799 = vpack.c.b16 %v698, %v697
    %v800 = vpack.c.b16 %v700, %v699
    %v801 = vpack.c.b16 %v702, %v701
    %v802 = vpack.c.b16 %v704, %v703
    %vm901 = vcmask 261120
    %v903 = vsel %vm901, %v109, 0
    %905 = vmatprep.subr.bf16.mxu0 0
    %906 = vmatpush1.bf16.msra.mxu0 %v712
    %907 = vmatprep.subr.bf16.mxu0 0
    %908 = vmatpush1.bf16.msra.mxu0 %v711
    %909 = vmatprep.subr.bf16.mxu0 0
    %910 = vmatpush1.bf16.msra.mxu0 %v710
    %911 = vmatprep.subr.bf16.mxu0 0
    %912 = vmatpush1.bf16.msra.mxu0 %v709
    %913 = vmatprep.subr.bf16.mxu0 0
    %914 = vmatpush1.bf16.msra.mxu0 %v708
    %915 = vmatprep.subr.bf16.mxu0 0
    %916 = vmatpush1.bf16.msra.mxu0 %v707
    %917 = vmatprep.subr.bf16.mxu0 0
    %918 = vmatpush1.bf16.msra.mxu0 %v706
    %919 = vmatprep.subr.bf16.mxu0 0
    %920 = vmatpush1.bf16.msra.mxu0 %v705
    %921 = vmatprep.subr.bf16.mxu0 0
    %922 = vmatpush2.bf16.msra.mxu0 %v720
    %923 = vmatprep.subr.bf16.mxu0 0
    %924 = vmatpush2.bf16.msra.mxu0 %v719
    %925 = vmatprep.subr.bf16.mxu0 0
    %926 = vmatpush2.bf16.msra.mxu0 %v718
    %927 = vmatprep.subr.bf16.mxu0 0
    %928 = vmatpush2.bf16.msra.mxu0 %v717
    %929 = vmatprep.subr.bf16.mxu0 0
    %930 = vmatpush2.bf16.msra.mxu0 %v716
    %931 = vmatprep.subr.bf16.mxu0 0
    %932 = vmatpush2.bf16.msra.mxu0 %v715
    %933 = vmatprep.subr.bf16.mxu0 0
    %934 = vmatpush2.bf16.msra.mxu0 %v714
    %935 = vmatprep.subr.bf16.mxu0 0
    %936 = vmatpush2.bf16.msra.mxu0 %v713
    %937 = vmatprep.mubr.bf16.mxu0 %v98
    %938 = vmatmul.mubr.bf16.gmra.mxu0 %v97
    %v939 = vpop.f32.mrf.mxu0
    %v940 = vadd.f32 %v311, %v939
    %v941 = vpop.f32.mrf.mxu0
    %v942 = vpop.f32.mrf.mxu0
    %v943 = vadd.f32 %v311, %v942
    %v944 = vpop.f32.mrf.mxu0
    %945 = vdwg.mxu0
    %946 = vmatprep.subr.bf16.mxu0 0
    %947 = vmatpush1.bf16.msra.mxu0 %v728
    %948 = vmatprep.subr.bf16.mxu0 0
    %949 = vmatpush1.bf16.msra.mxu0 %v727
    %950 = vmatprep.subr.bf16.mxu0 0
    %951 = vmatpush1.bf16.msra.mxu0 %v726
    %952 = vmatprep.subr.bf16.mxu0 0
    %953 = vmatpush1.bf16.msra.mxu0 %v725
    %954 = vmatprep.subr.bf16.mxu0 0
    %955 = vmatpush1.bf16.msra.mxu0 %v724
    %956 = vmatprep.subr.bf16.mxu0 0
    %957 = vmatpush1.bf16.msra.mxu0 %v723
    %958 = vmatprep.subr.bf16.mxu0 0
    %959 = vmatpush1.bf16.msra.mxu0 %v722
    %960 = vmatprep.subr.bf16.mxu0 0
    %961 = vmatpush1.bf16.msra.mxu0 %v721
    %962 = vmatprep.subr.bf16.mxu0 0
    %963 = vmatpush2.bf16.msra.mxu0 %v736
    %964 = vmatprep.subr.bf16.mxu0 0
    %965 = vmatpush2.bf16.msra.mxu0 %v735
    %966 = vmatprep.subr.bf16.mxu0 0
    %967 = vmatpush2.bf16.msra.mxu0 %v734
    %968 = vmatprep.subr.bf16.mxu0 0
    %969 = vmatpush2.bf16.msra.mxu0 %v733
    %970 = vmatprep.subr.bf16.mxu0 0
    %971 = vmatpush2.bf16.msra.mxu0 %v732
    %972 = vmatprep.subr.bf16.mxu0 0
    %973 = vmatpush2.bf16.msra.mxu0 %v731
    %974 = vmatprep.subr.bf16.mxu0 0
    %975 = vmatpush2.bf16.msra.mxu0 %v730
    %976 = vmatprep.subr.bf16.mxu0 0
    %977 = vmatpush2.bf16.msra.mxu0 %v729
    %978 = vmatprep.mubr.bf16.mxu0 %v100
    %979 = vmatmul.mubr.bf16.gmra.mxu0 %v99
    %v980 = vpop.f32.mrf.mxu0
    %v981 = vadd.f32 %v940, %v980
    %v982 = vpop.f32.mrf.mxu0
    %v983 = vpop.f32.mrf.mxu0
    %v984 = vadd.f32 %v943, %v983
    %v985 = vpop.f32.mrf.mxu0
    %986 = vdwg.mxu0
    %987 = vmatprep.subr.bf16.mxu0 0
    %988 = vmatpush1.bf16.msra.mxu0 %v744
    %989 = vmatprep.subr.bf16.mxu0 0
    %990 = vmatpush1.bf16.msra.mxu0 %v743
    %991 = vmatprep.subr.bf16.mxu0 0
    %992 = vmatpush1.bf16.msra.mxu0 %v742
    %993 = vmatprep.subr.bf16.mxu0 0
    %994 = vmatpush1.bf16.msra.mxu0 %v741
    %995 = vmatprep.subr.bf16.mxu0 0
    %996 = vmatpush1.bf16.msra.mxu0 %v740
    %997 = vmatprep.subr.bf16.mxu0 0
    %998 = vmatpush1.bf16.msra.mxu0 %v739
    %999 = vmatprep.subr.bf16.mxu0 0
    %1000 = vmatpush1.bf16.msra.mxu0 %v738
    %1001 = vmatprep.subr.bf16.mxu0 0
    %1002 = vmatpush1.bf16.msra.mxu0 %v737
    %1003 = vmatprep.subr.bf16.mxu0 0
    %1004 = vmatpush2.bf16.msra.mxu0 %v752
    %1005 = vmatprep.subr.bf16.mxu0 0
    %1006 = vmatpush2.bf16.msra.mxu0 %v751
    %1007 = vmatprep.subr.bf16.mxu0 0
    %1008 = vmatpush2.bf16.msra.mxu0 %v750
    %1009 = vmatprep.subr.bf16.mxu0 0
    %1010 = vmatpush2.bf16.msra.mxu0 %v749
    %1011 = vmatprep.subr.bf16.mxu0 0
    %1012 = vmatpush2.bf16.msra.mxu0 %v748
    %1013 = vmatprep.subr.bf16.mxu0 0
    %1014 = vmatpush2.bf16.msra.mxu0 %v747
    %1015 = vmatprep.subr.bf16.mxu0 0
    %1016 = vmatpush2.bf16.msra.mxu0 %v746
    %1017 = vmatprep.subr.bf16.mxu0 0
    %1018 = vmatpush2.bf16.msra.mxu0 %v745
    %1019 = vmatprep.mubr.bf16.mxu0 %v102
    %1020 = vmatmul.mubr.bf16.gmra.mxu0 %v101
    %v1021 = vpop.f32.mrf.mxu0
    %v1022 = vadd.f32 %v981, %v1021
    %v1023 = vpop.f32.mrf.mxu0
    %v1024 = vpop.f32.mrf.mxu0
    %v1025 = vadd.f32 %v984, %v1024
    %v1026 = vpop.f32.mrf.mxu0
    %1027 = vdwg.mxu0
    %1028 = vmatprep.subr.bf16.mxu0 0
    %1029 = vmatpush1.bf16.msra.mxu0 %v760
    %1030 = vmatprep.subr.bf16.mxu0 0
    %1031 = vmatpush1.bf16.msra.mxu0 %v759
    %1032 = vmatprep.subr.bf16.mxu0 0
    %1033 = vmatpush1.bf16.msra.mxu0 %v758
    %1034 = vmatprep.subr.bf16.mxu0 0
    %1035 = vmatpush1.bf16.msra.mxu0 %v757
    %1036 = vmatprep.subr.bf16.mxu0 0
    %1037 = vmatpush1.bf16.msra.mxu0 %v756
    %1038 = vmatprep.subr.bf16.mxu0 0
    %1039 = vmatpush1.bf16.msra.mxu0 %v755
    %1040 = vmatprep.subr.bf16.mxu0 0
    %1041 = vmatpush1.bf16.msra.mxu0 %v754
    %1042 = vmatprep.subr.bf16.mxu0 0
    %1043 = vmatpush1.bf16.msra.mxu0 %v753
    %1044 = vmatprep.subr.bf16.mxu0 0
    %1045 = vmatpush2.bf16.msra.mxu0 %v768
    %1046 = vmatprep.subr.bf16.mxu0 0
    %1047 = vmatpush2.bf16.msra.mxu0 %v767
    %1048 = vmatprep.subr.bf16.mxu0 0
    %1049 = vmatpush2.bf16.msra.mxu0 %v766
    %1050 = vmatprep.subr.bf16.mxu0 0
    %1051 = vmatpush2.bf16.msra.mxu0 %v765
    %1052 = vmatprep.subr.bf16.mxu0 0
    %1053 = vmatpush2.bf16.msra.mxu0 %v764
    %1054 = vmatprep.subr.bf16.mxu0 0
    %1055 = vmatpush2.bf16.msra.mxu0 %v763
    %1056 = vmatprep.subr.bf16.mxu0 0
    %1057 = vmatpush2.bf16.msra.mxu0 %v762
    %1058 = vmatprep.subr.bf16.mxu0 0
    %1059 = vmatpush2.bf16.msra.mxu0 %v761
    %1060 = vmatprep.mubr.bf16.mxu0 %v104
    %1061 = vmatmul.mubr.bf16.gmra.mxu0 %v103
    %v1062 = vpop.f32.mrf.mxu0
    %v1063 = vadd.f32 %v1022, %v1062
    %v1064 = vpop.f32.mrf.mxu0
    %v1065 = vpop.f32.mrf.mxu0
    %v1066 = vadd.f32 %v1025, %v1065
    %v1067 = vpop.f32.mrf.mxu0
    %1068 = vdwg.mxu0
    %1069 = vmatprep.subr.bf16.mxu0 0
    %1070 = vmatpush1.bf16.msra.mxu0 %v776
    %1071 = vmatprep.subr.bf16.mxu0 0
    %1072 = vmatpush1.bf16.msra.mxu0 %v775
    %1073 = vmatprep.subr.bf16.mxu0 0
    %1074 = vmatpush1.bf16.msra.mxu0 %v774
    %1075 = vmatprep.subr.bf16.mxu0 0
    %1076 = vmatpush1.bf16.msra.mxu0 %v773
    %1077 = vmatprep.subr.bf16.mxu0 0
    %1078 = vmatpush1.bf16.msra.mxu0 %v772
    %1079 = vmatprep.subr.bf16.mxu0 0
    %1080 = vmatpush1.bf16.msra.mxu0 %v771
    %1081 = vmatprep.subr.bf16.mxu0 0
    %1082 = vmatpush1.bf16.msra.mxu0 %v770
    %1083 = vmatprep.subr.bf16.mxu0 0
    %1084 = vmatpush1.bf16.msra.mxu0 %v769
    %1085 = vmatprep.subr.bf16.mxu0 0
    %1086 = vmatpush2.bf16.msra.mxu0 %v784
    %1087 = vmatprep.subr.bf16.mxu0 0
    %1088 = vmatpush2.bf16.msra.mxu0 %v783
    %1089 = vmatprep.subr.bf16.mxu0 0
    %1090 = vmatpush2.bf16.msra.mxu0 %v782
    %1091 = vmatprep.subr.bf16.mxu0 0
    %1092 = vmatpush2.bf16.msra.mxu0 %v781
    %1093 = vmatprep.subr.bf16.mxu0 0
    %1094 = vmatpush2.bf16.msra.mxu0 %v780
    %1095 = vmatprep.subr.bf16.mxu0 0
    %1096 = vmatpush2.bf16.msra.mxu0 %v779
    %1097 = vmatprep.subr.bf16.mxu0 0
    %1098 = vmatpush2.bf16.msra.mxu0 %v778
    %1099 = vmatprep.subr.bf16.mxu0 0
    %1100 = vmatpush2.bf16.msra.mxu0 %v777
    %1101 = vmatprep.mubr.bf16.mxu0 %v106
    %1102 = vmatmul.mubr.bf16.gmra.mxu0 %v105
    %v1103 = vpop.f32.mrf.mxu0
    %v1104 = vadd.f32 %v1063, %v1103
    %v1105 = vpop.f32.mrf.mxu0
    %v1106 = vpop.f32.mrf.mxu0
    %v1107 = vadd.f32 %v1066, %v1106
    %v1108 = vpop.f32.mrf.mxu0
    %1109 = vdwg.mxu0
    %1110 = vmatprep.subr.bf16.mxu0 0
    %1111 = vmatpush1.bf16.msra.mxu0 %v792
    %1112 = vmatprep.subr.bf16.mxu0 0
    %1113 = vmatpush1.bf16.msra.mxu0 %v791
    %1114 = vmatprep.subr.bf16.mxu0 0
    %1115 = vmatpush1.bf16.msra.mxu0 %v790
    %1116 = vmatprep.subr.bf16.mxu0 0
    %1117 = vmatpush1.bf16.msra.mxu0 %v789
    %1118 = vmatprep.subr.bf16.mxu0 0
    %1119 = vmatpush1.bf16.msra.mxu0 %v788
    %1120 = vmatprep.subr.bf16.mxu0 0
    %1121 = vmatpush1.bf16.msra.mxu0 %v787
    %1122 = vmatprep.subr.bf16.mxu0 0
    %1123 = vmatpush1.bf16.msra.mxu0 %v786
    %1124 = vmatprep.subr.bf16.mxu0 0
    %1125 = vmatpush1.bf16.msra.mxu0 %v785
    %1126 = vmatprep.subr.bf16.mxu0 0
    %1127 = vmatpush2.bf16.msra.mxu0 %v800
    %1128 = vmatprep.subr.bf16.mxu0 0
    %1129 = vmatpush2.bf16.msra.mxu0 %v799
    %1130 = vmatprep.subr.bf16.mxu0 0
    %1131 = vmatpush2.bf16.msra.mxu0 %v798
    %1132 = vmatprep.subr.bf16.mxu0 0
    %1133 = vmatpush2.bf16.msra.mxu0 %v797
    %1134 = vmatprep.subr.bf16.mxu0 0
    %1135 = vmatpush2.bf16.msra.mxu0 %v796
    %1136 = vmatprep.subr.bf16.mxu0 0
    %1137 = vmatpush2.bf16.msra.mxu0 %v795
    %1138 = vmatprep.subr.bf16.mxu0 0
    %1139 = vmatpush2.bf16.msra.mxu0 %v794
    %1140 = vmatprep.subr.bf16.mxu0 0
    %1141 = vmatpush2.bf16.msra.mxu0 %v793
    %1142 = vmatprep.mubr.bf16.mxu0 %v108
    %1143 = vmatmul.mubr.bf16.gmra.mxu0 %v107
    %v1144 = vpop.f32.mrf.mxu0
    %v1145 = vadd.f32 %v1104, %v1144
    %v1146 = vpop.f32.mrf.mxu0
    %v1147 = vpop.f32.mrf.mxu0
    %v1148 = vadd.f32 %v1107, %v1147
    %v1149 = vpop.f32.mrf.mxu0
    %1150 = vdwg.mxu0
    %1151 = vmatprep.subr.bf16.mxu0 0
    %1152 = vmatpush1.bf16.msra.mxu0 0
    %1153 = vmatprep.subr.bf16.mxu0 0
    %1154 = vmatpush1.bf16.msra.mxu0 0
    %1155 = vmatprep.subr.bf16.mxu0 0
    %1156 = vmatpush1.bf16.msra.mxu0 0
    %1157 = vmatprep.subr.bf16.mxu0 0
    %1158 = vmatpush1.bf16.msra.mxu0 0
    %1159 = vmatprep.subr.bf16.mxu0 0
    %1160 = vmatpush1.bf16.msra.mxu0 0
    %1161 = vmatprep.subr.bf16.mxu0 0
    %1162 = vmatpush1.bf16.msra.mxu0 0
    %1163 = vmatprep.subr.bf16.mxu0 0
    %1164 = vmatpush1.bf16.msra.mxu0 %v802
    %1165 = vmatprep.subr.bf16.mxu0 0
    %1166 = vmatpush1.bf16.msra.mxu0 %v801
    %1167 = vmatprep.subr.bf16.mxu0 0
    %1168 = vmatpush2.bf16.msra.mxu0 0
    %1169 = vmatprep.subr.bf16.mxu0 0
    %1170 = vmatpush2.bf16.msra.mxu0 0
    %1171 = vmatprep.subr.bf16.mxu0 0
    %1172 = vmatpush2.bf16.msra.mxu0 0
    %1173 = vmatprep.subr.bf16.mxu0 0
    %1174 = vmatpush2.bf16.msra.mxu0 0
    %1175 = vmatprep.subr.bf16.mxu0 0
    %1176 = vmatpush2.bf16.msra.mxu0 0
    %1177 = vmatprep.subr.bf16.mxu0 0
    %1178 = vmatpush2.bf16.msra.mxu0 0
    %1179 = vmatprep.subr.bf16.mxu0 0
    %1180 = vmatpush2.bf16.msra.mxu0 0
    %1181 = vmatprep.subr.bf16.mxu0 0
    %1182 = vmatpush2.bf16.msra.mxu0 0
    %1183 = vmatprep.mubr.bf16.mxu0 0
    %1184 = vmatmul.mubr.bf16.gmra.mxu0 %v903
    %v1185 = vpop.f32.mrf.mxu0
    %v1186 = vadd.f32 %v1145, %v1185
    %v1187 = vpop.f32.mrf.mxu0
    %v1188 = vpop.f32.mrf.mxu0
    %v1189 = vadd.f32 %v1148, %v1188
    %v1190 = vpop.f32.mrf.mxu0
    %1191 = vdwg.mxu0
    %v1192 = vmax.f32 %v1186, 0.0
    %v1193 = vmax.f32 %v1189, 0.0
    %v1194 = vpack.c.bf16 %v1193, %v1192
    %v1195 = vld [vmem:[%s3] sm:$0xf]
    %v1196 = vld [vmem:[%s3 + $0x4] sm:$0xf]
    %v1197 = vld [vmem:[%s3 + $0x8] sm:$0xf]
    %v1198 = vld [vmem:[%s3 + $0xc] sm:$0xf]
    %v1199 = vld [vmem:[%s3 + $0x10] sm:$0xf]
    %v1200 = vld [vmem:[%s3 + $0x14] sm:$0xf]
    %v1201 = vld [vmem:[%s3 + $0x18] sm:$0xf]
    %v1202 = vld [vmem:[%s3 + $0x1c] sm:$0xf]
    %v1203 = vld [vmem:[%s3 + $0x20] sm:$0xf]
    %v1204 = vld [vmem:[%s3 + $0x24] sm:$0xf]
    %v1205 = vld [vmem:[%s3 + $0x28] sm:$0xf]
    %v1206 = vld [vmem:[%s3 + $0x2c] sm:$0xf]
    %v1207 = vld [vmem:[%s3 + $0x30] sm:$0xf]
    %v1208 = vld [vmem:[%s3 + $0x34] sm:$0xf]
    %v1209 = vld [vmem:[%s3 + $0x38] sm:$0xf]
    %v1210 = vld [vmem:[%s3 + $0x3c] sm:$0xf]
    %v1211 = vld [vmem:[%s4] sm:$0x1]
    %v1213 = vlaneseq
    %v1214 = vshrl.u32 %v1213, 7
    %v1215 = vsub.s32 0, %v1214
    %v1216 = vrot.slane %v1211, %v1215
    %v1234 = vunpack.c.l.b16 %v1195
    %v1235 = vunpack.c.l.b16 %v1196
    %v1236 = vunpack.c.l.b16 %v1197
    %v1237 = vunpack.c.l.b16 %v1198
    %v1238 = vunpack.c.l.b16 %v1199
    %v1239 = vunpack.c.l.b16 %v1200
    %v1240 = vunpack.c.l.b16 %v1201
    %v1241 = vunpack.c.l.b16 %v1202
    %v1242 = vunpack.c.l.b16 %v1203
    %v1243 = vunpack.c.l.b16 %v1204
    %v1244 = vunpack.c.l.b16 %v1205
    %v1245 = vunpack.c.l.b16 %v1206
    %v1246 = vunpack.c.l.b16 %v1207
    %v1247 = vunpack.c.l.b16 %v1208
    %v1248 = vunpack.c.l.b16 %v1209
    %v1249 = vunpack.c.l.b16 %v1210
    %v1250 = vpack.c.b16 %v1235, %v1234
    %v1251 = vpack.c.b16 %v1237, %v1236
    %v1252 = vpack.c.b16 %v1239, %v1238
    %v1253 = vpack.c.b16 %v1241, %v1240
    %v1254 = vpack.c.b16 %v1243, %v1242
    %v1255 = vpack.c.b16 %v1245, %v1244
    %v1256 = vpack.c.b16 %v1247, %v1246
    %v1257 = vpack.c.b16 %v1249, %v1248
    %1266 = vmatprep.subr.bf16.mxu0 0
    %1267 = vmatpush1.bf16.msra.mxu0 %v1257
    %1268 = vmatprep.subr.bf16.mxu0 0
    %1269 = vmatpush1.bf16.msra.mxu0 %v1256
    %1270 = vmatprep.subr.bf16.mxu0 0
    %1271 = vmatpush1.bf16.msra.mxu0 %v1255
    %1272 = vmatprep.subr.bf16.mxu0 0
    %1273 = vmatpush1.bf16.msra.mxu0 %v1254
    %1274 = vmatprep.subr.bf16.mxu0 0
    %1275 = vmatpush1.bf16.msra.mxu0 %v1253
    %1276 = vmatprep.subr.bf16.mxu0 0
    %1277 = vmatpush1.bf16.msra.mxu0 %v1252
    %1278 = vmatprep.subr.bf16.mxu0 0
    %1279 = vmatpush1.bf16.msra.mxu0 %v1251
    %1280 = vmatprep.subr.bf16.mxu0 0
    %1281 = vmatpush1.bf16.msra.mxu0 %v1250
    %1282 = vmatprep.subr.bf16.mxu0 0
    %1283 = vmatpush2.bf16.msra.mxu0 0
    %1284 = vmatprep.subr.bf16.mxu0 0
    %1285 = vmatpush2.bf16.msra.mxu0 0
    %1286 = vmatprep.subr.bf16.mxu0 0
    %1287 = vmatpush2.bf16.msra.mxu0 0
    %1288 = vmatprep.subr.bf16.mxu0 0
    %1289 = vmatpush2.bf16.msra.mxu0 0
    %1290 = vmatprep.subr.bf16.mxu0 0
    %1291 = vmatpush2.bf16.msra.mxu0 0
    %1292 = vmatprep.subr.bf16.mxu0 0
    %1293 = vmatpush2.bf16.msra.mxu0 0
    %1294 = vmatprep.subr.bf16.mxu0 0
    %1295 = vmatpush2.bf16.msra.mxu0 0
    %1296 = vmatprep.subr.bf16.mxu0 0
    %1297 = vmatpush2.bf16.msra.mxu0 0
    %1298 = vmatprep.mubr.bf16.mxu0 0
    %1299 = vmatmul.mubr.bf16.gmra.mxu0 %v1194
    %v1300 = vpop.f32.mrf.mxu0
    %v1301 = vadd.f32 %v1216, %v1300
    %v1302 = vpop.f32.mrf.mxu0
    %v1303 = vpop.f32.mrf.mxu0
    %v1304 = vadd.f32 %v1216, %v1303
    %v1305 = vpop.f32.mrf.mxu0
    %1306 = vdwg.mxu0
    %v1307 = vmax.f32 %v1301, 0.0
    %v1308 = vmax.f32 %v1304, 0.0
    %v1309 = vpack.c.bf16 %v1308, %v1307
    %v1310 = vld [vmem:[%s5] sm:$0xf]
    %v1311 = vld [vmem:[%s5 + $0x4] sm:$0xf]
    %v1312 = vld [vmem:[%s5 + $0x8] sm:$0xf]
    %v1313 = vld [vmem:[%s5 + $0xc] sm:$0xf]
    %v1314 = vld [vmem:[%s5 + $0x10] sm:$0xf]
    %v1315 = vld [vmem:[%s5 + $0x14] sm:$0xf]
    %v1316 = vld [vmem:[%s5 + $0x18] sm:$0xf]
    %v1317 = vld [vmem:[%s5 + $0x1c] sm:$0xf]
    %v1318 = vld [vmem:[%s5 + $0x20] sm:$0xf]
    %v1319 = vld [vmem:[%s5 + $0x24] sm:$0xf]
    %v1320 = vld [vmem:[%s5 + $0x28] sm:$0xf]
    %v1321 = vld [vmem:[%s5 + $0x2c] sm:$0xf]
    %v1322 = vld [vmem:[%s5 + $0x30] sm:$0xf]
    %v1323 = vld [vmem:[%s5 + $0x34] sm:$0xf]
    %v1324 = vld [vmem:[%s5 + $0x38] sm:$0xf]
    %v1325 = vld [vmem:[%s5 + $0x3c] sm:$0xf]
    %v1326 = vld [vmem:[%s6] sm:$0x1]
    %v1328 = vlaneseq
    %v1329 = vshrl.u32 %v1328, 7
    %v1330 = vsub.s32 0, %v1329
    %v1331 = vrot.slane %v1326, %v1330
    %v1349 = vunpack.c.l.b16 %v1310
    %v1350 = vunpack.c.l.b16 %v1311
    %v1351 = vunpack.c.l.b16 %v1312
    %v1352 = vunpack.c.l.b16 %v1313
    %v1353 = vunpack.c.l.b16 %v1314
    %v1354 = vunpack.c.l.b16 %v1315
    %v1355 = vunpack.c.l.b16 %v1316
    %v1356 = vunpack.c.l.b16 %v1317
    %v1357 = vunpack.c.l.b16 %v1318
    %v1358 = vunpack.c.l.b16 %v1319
    %v1359 = vunpack.c.l.b16 %v1320
    %v1360 = vunpack.c.l.b16 %v1321
    %v1361 = vunpack.c.l.b16 %v1322
    %v1362 = vunpack.c.l.b16 %v1323
    %v1363 = vunpack.c.l.b16 %v1324
    %v1364 = vunpack.c.l.b16 %v1325
    %v1365 = vpack.c.b16 %v1350, %v1349
    %v1366 = vpack.c.b16 %v1352, %v1351
    %v1367 = vpack.c.b16 %v1354, %v1353
    %v1368 = vpack.c.b16 %v1356, %v1355
    %v1369 = vpack.c.b16 %v1358, %v1357
    %v1370 = vpack.c.b16 %v1360, %v1359
    %v1371 = vpack.c.b16 %v1362, %v1361
    %v1372 = vpack.c.b16 %v1364, %v1363
    %1381 = vmatprep.subr.bf16.mxu0 0
    %1382 = vmatpush1.bf16.msra.mxu0 %v1372
    %1383 = vmatprep.subr.bf16.mxu0 0
    %1384 = vmatpush1.bf16.msra.mxu0 %v1371
    %1385 = vmatprep.subr.bf16.mxu0 0
    %1386 = vmatpush1.bf16.msra.mxu0 %v1370
    %1387 = vmatprep.subr.bf16.mxu0 0
    %1388 = vmatpush1.bf16.msra.mxu0 %v1369
    %1389 = vmatprep.subr.bf16.mxu0 0
    %1390 = vmatpush1.bf16.msra.mxu0 %v1368
    %1391 = vmatprep.subr.bf16.mxu0 0
    %1392 = vmatpush1.bf16.msra.mxu0 %v1367
    %1393 = vmatprep.subr.bf16.mxu0 0
    %1394 = vmatpush1.bf16.msra.mxu0 %v1366
    %1395 = vmatprep.subr.bf16.mxu0 0
    %1396 = vmatpush1.bf16.msra.mxu0 %v1365
    %1397 = vmatprep.subr.bf16.mxu0 0
    %1398 = vmatpush2.bf16.msra.mxu0 0
    %1399 = vmatprep.subr.bf16.mxu0 0
    %1400 = vmatpush2.bf16.msra.mxu0 0
    %1401 = vmatprep.subr.bf16.mxu0 0
    %1402 = vmatpush2.bf16.msra.mxu0 0
    %1403 = vmatprep.subr.bf16.mxu0 0
    %1404 = vmatpush2.bf16.msra.mxu0 0
    %1405 = vmatprep.subr.bf16.mxu0 0
    %1406 = vmatpush2.bf16.msra.mxu0 0
    %1407 = vmatprep.subr.bf16.mxu0 0
    %1408 = vmatpush2.bf16.msra.mxu0 0
    %1409 = vmatprep.subr.bf16.mxu0 0
    %1410 = vmatpush2.bf16.msra.mxu0 0
    %1411 = vmatprep.subr.bf16.mxu0 0
    %1412 = vmatpush2.bf16.msra.mxu0 0
    %1413 = vmatprep.mubr.bf16.mxu0 0
    %1414 = vmatmul.mubr.bf16.gmra.mxu0 %v1309
    %v1415 = vpop.f32.mrf.mxu0
    %v1416 = vadd.f32 %v1331, %v1415
    %v1417 = vpop.f32.mrf.mxu0
    %v1418 = vpop.f32.mrf.mxu0
    %v1419 = vadd.f32 %v1331, %v1418
    %v1420 = vpop.f32.mrf.mxu0
    %1421 = vdwg.mxu0
    %1422 = vmax.xlane.f32.xlu0 %v1416
    %v1423 = vpop.xlane.xlu0 %1422
    %1424 = vmax.xlane.f32.xlu0 %v1419
    %v1425 = vpop.xlane.xlu0 %1424
    %v1426 = vsub.f32 %v1416, %v1423
    %v1427 = vsub.f32 %v1419, %v1425
    %v1428 = vmul.f32 %v1426, 1.442695
    %v1429 = vpow.pop %v1428
    %v1430 = vmul.f32 %v1427, 1.442695
    %v1431 = vpow.pop %v1430
    %1432 = vadd.xlane.f32.xlu0 %v1429
    %v1433 = vpop.xlane.xlu0 %1432
    %1434 = vadd.xlane.f32.xlu0 %v1431
    %v1435 = vpop.xlane.xlu0 %1434
    %v1436 = vrcp.pop %v1433
    %v1437 = vrcp.pop %v1435
    %v1438 = vmul.f32 %v1429, %v1436
    %v1439 = vmul.f32 %v1431, %v1437
    %v1440 = vpack.c.bf16 %v1439, %v1438
    %v1441 = vld [vmem:[%s7] sm:$0xff]
    %v1442 = vld [vmem:[%s7 + $0x8] sm:$0xff]
    %v1443 = vld [vmem:[%s7 + $0x10] sm:$0xff]
    %v1444 = vld [vmem:[%s7 + $0x18] sm:$0xff]
    %v1445 = vld [vmem:[%s7 + $0x20] sm:$0xff]
    %v1446 = vld [vmem:[%s7 + $0x28] sm:$0xff]
    %v1447 = vld [vmem:[%s7 + $0x30] sm:$0xff]
    %v1448 = vld [vmem:[%s7 + $0x38] sm:$0xff]
    %v1449 = vld [vmem:[%s7 + $0x40] sm:$0xff]
    %v1450 = vld [vmem:[%s7 + $0x48] sm:$0xff]
    %v1451 = vld [vmem:[%s7 + $0x50] sm:$0xff]
    %v1452 = vld [vmem:[%s7 + $0x58] sm:$0xff]
    %v1453 = vld [vmem:[%s7 + $0x60] sm:$0xff]
    %v1454 = vld [vmem:[%s7 + $0x68] sm:$0xff]
    %v1455 = vld [vmem:[%s7 + $0x70] sm:$0xff]
    %v1456 = vld [vmem:[%s7 + $0x78] sm:$0xff]
    %v1457 = vld [vmem:[%s8] sm:$0x3]
    %v1459 = vlaneseq
    %v1460 = vshrl.u32 %v1459, 7
    %v1461 = vsub.s32 0, %v1460
    %v1462 = vrot.slane %v1457, %v1461
    %v1463 = vlaneseq
    %v1464 = vshrl.u32 %v1463, 7
    %v1465 = vsub.s32 1, %v1464
    %v1466 = vrot.slane %v1457, %v1465
    %v1485 = vunpack.c.l.b16 %v1441
    %v1486 = vunpack.c.h.b16 %v1441
    %v1487 = vunpack.c.l.b16 %v1442
    %v1488 = vunpack.c.h.b16 %v1442
    %v1489 = vunpack.c.l.b16 %v1443
    %v1490 = vunpack.c.h.b16 %v1443
    %v1491 = vunpack.c.l.b16 %v1444
    %v1492 = vunpack.c.h.b16 %v1444
    %v1493 = vunpack.c.l.b16 %v1445
    %v1494 = vunpack.c.h.b16 %v1445
    %v1495 = vunpack.c.l.b16 %v1446
    %v1496 = vunpack.c.h.b16 %v1446
    %v1497 = vunpack.c.l.b16 %v1447
    %v1498 = vunpack.c.h.b16 %v1447
    %v1499 = vunpack.c.l.b16 %v1448
    %v1500 = vunpack.c.h.b16 %v1448
    %v1501 = vunpack.c.l.b16 %v1449
    %v1502 = vunpack.c.h.b16 %v1449
    %v1503 = vunpack.c.l.b16 %v1450
    %v1504 = vunpack.c.h.b16 %v1450
    %v1505 = vunpack.c.l.b16 %v1451
    %v1506 = vunpack.c.h.b16 %v1451
    %v1507 = vunpack.c.l.b16 %v1452
    %v1508 = vunpack.c.h.b16 %v1452
    %v1509 = vunpack.c.l.b16 %v1453
    %v1510 = vunpack.c.h.b16 %v1453
    %v1511 = vunpack.c.l.b16 %v1454
    %v1512 = vunpack.c.h.b16 %v1454
    %v1513 = vunpack.c.l.b16 %v1455
    %v1514 = vunpack.c.h.b16 %v1455
    %v1515 = vunpack.c.l.b16 %v1456
    %v1516 = vunpack.c.h.b16 %v1456
    %v1517 = vpack.c.b16 %v1487, %v1485
    %v1518 = vpack.c.b16 %v1488, %v1486
    %v1519 = vpack.c.b16 %v1491, %v1489
    %v1520 = vpack.c.b16 %v1492, %v1490
    %v1521 = vpack.c.b16 %v1495, %v1493
    %v1522 = vpack.c.b16 %v1496, %v1494
    %v1523 = vpack.c.b16 %v1499, %v1497
    %v1524 = vpack.c.b16 %v1500, %v1498
    %v1525 = vpack.c.b16 %v1503, %v1501
    %v1526 = vpack.c.b16 %v1504, %v1502
    %v1527 = vpack.c.b16 %v1507, %v1505
    %v1528 = vpack.c.b16 %v1508, %v1506
    %v1529 = vpack.c.b16 %v1511, %v1509
    %v1530 = vpack.c.b16 %v1512, %v1510
    %v1531 = vpack.c.b16 %v1515, %v1513
    %v1532 = vpack.c.b16 %v1516, %v1514
    %1549 = vmatprep.subr.bf16.mxu0 %v1532
    %1550 = vmatpush1.bf16.msra.mxu0 %v1531
    %1551 = vmatprep.subr.bf16.mxu0 %v1530
    %1552 = vmatpush1.bf16.msra.mxu0 %v1529
    %1553 = vmatprep.subr.bf16.mxu0 %v1528
    %1554 = vmatpush1.bf16.msra.mxu0 %v1527
    %1555 = vmatprep.subr.bf16.mxu0 %v1526
    %1556 = vmatpush1.bf16.msra.mxu0 %v1525
    %1557 = vmatprep.subr.bf16.mxu0 %v1524
    %1558 = vmatpush1.bf16.msra.mxu0 %v1523
    %1559 = vmatprep.subr.bf16.mxu0 %v1522
    %1560 = vmatpush1.bf16.msra.mxu0 %v1521
    %1561 = vmatprep.subr.bf16.mxu0 %v1520
    %1562 = vmatpush1.bf16.msra.mxu0 %v1519
    %1563 = vmatprep.subr.bf16.mxu0 %v1518
    %1564 = vmatpush1.bf16.msra.mxu0 %v1517
    %1565 = vmatprep.subr.bf16.mxu0 0
    %1566 = vmatpush2.bf16.msra.mxu0 0
    %1567 = vmatprep.subr.bf16.mxu0 0
    %1568 = vmatpush2.bf16.msra.mxu0 0
    %1569 = vmatprep.subr.bf16.mxu0 0
    %1570 = vmatpush2.bf16.msra.mxu0 0
    %1571 = vmatprep.subr.bf16.mxu0 0
    %1572 = vmatpush2.bf16.msra.mxu0 0
    %1573 = vmatprep.subr.bf16.mxu0 0
    %1574 = vmatpush2.bf16.msra.mxu0 0
    %1575 = vmatprep.subr.bf16.mxu0 0
    %1576 = vmatpush2.bf16.msra.mxu0 0
    %1577 = vmatprep.subr.bf16.mxu0 0
    %1578 = vmatpush2.bf16.msra.mxu0 0
    %1579 = vmatprep.subr.bf16.mxu0 0
    %1580 = vmatpush2.bf16.msra.mxu0 0
    %1581 = vmatprep.mubr.bf16.mxu0 0
    %1582 = vmatmul.mubr.bf16.gmra.mxu0 %v1440
    %v1583 = vpop.f32.mrf.mxu0
    %v1584 = vadd.f32 %v1462, %v1583
    %v1585 = vpop.f32.mrf.mxu0
    %v1586 = vadd.f32 %v1466, %v1585
    %v1587 = vpop.f32.mrf.mxu0
    %v1588 = vadd.f32 %v1462, %v1587
    %v1589 = vpop.f32.mrf.mxu0
    %v1590 = vadd.f32 %v1466, %v1589
    %1591 = vdwg.mxu0
    %v1592 = vmax.f32 %v1584, 0.0
    %v1593 = vmax.f32 %v1586, 0.0
    %v1594 = vmax.f32 %v1588, 0.0
    %v1595 = vmax.f32 %v1590, 0.0
    %v1596 = vpack.c.bf16 %v1594, %v1592
    %v1597 = vpack.c.bf16 %v1595, %v1593
    %v1598 = vld [vmem:[%s9] sm:$0xf]
    %v1599 = vld [vmem:[%s9 + $0x4] sm:$0xf]
    %v1600 = vld [vmem:[%s9 + $0x8] sm:$0xf]
    %v1601 = vld [vmem:[%s9 + $0xc] sm:$0xf]
    %v1602 = vld [vmem:[%s9 + $0x10] sm:$0xf]
    %v1603 = vld [vmem:[%s9 + $0x14] sm:$0xf]
    %v1604 = vld [vmem:[%s9 + $0x18] sm:$0xf]
    %v1605 = vld [vmem:[%s9 + $0x1c] sm:$0xf]
    %v1606 = vld [vmem:[%s9 + $0x20] sm:$0xf]
    %v1607 = vld [vmem:[%s9 + $0x24] sm:$0xf]
    %v1608 = vld [vmem:[%s9 + $0x28] sm:$0xf]
    %v1609 = vld [vmem:[%s9 + $0x2c] sm:$0xf]
    %v1610 = vld [vmem:[%s9 + $0x30] sm:$0xf]
    %v1611 = vld [vmem:[%s9 + $0x34] sm:$0xf]
    %v1612 = vld [vmem:[%s9 + $0x38] sm:$0xf]
    %v1613 = vld [vmem:[%s9 + $0x3c] sm:$0xf]
    %v1614 = vld [vmem:[%s10] sm:$0x1]
    %v1616 = vlaneseq
    %v1617 = vshrl.u32 %v1616, 7
    %v1618 = vsub.s32 0, %v1617
    %v1619 = vrot.slane %v1614, %v1618
    %v1637 = vunpack.c.l.b16 %v1598
    %v1638 = vunpack.c.l.b16 %v1599
    %v1639 = vunpack.c.l.b16 %v1600
    %v1640 = vunpack.c.l.b16 %v1601
    %v1641 = vunpack.c.l.b16 %v1602
    %v1642 = vunpack.c.l.b16 %v1603
    %v1643 = vunpack.c.l.b16 %v1604
    %v1644 = vunpack.c.l.b16 %v1605
    %v1645 = vunpack.c.l.b16 %v1606
    %v1646 = vunpack.c.l.b16 %v1607
    %v1647 = vunpack.c.l.b16 %v1608
    %v1648 = vunpack.c.l.b16 %v1609
    %v1649 = vunpack.c.l.b16 %v1610
    %v1650 = vunpack.c.l.b16 %v1611
    %v1651 = vunpack.c.l.b16 %v1612
    %v1652 = vunpack.c.l.b16 %v1613
    %v1653 = vpack.c.b16 %v1638, %v1637
    %v1654 = vpack.c.b16 %v1640, %v1639
    %v1655 = vpack.c.b16 %v1642, %v1641
    %v1656 = vpack.c.b16 %v1644, %v1643
    %v1657 = vpack.c.b16 %v1646, %v1645
    %v1658 = vpack.c.b16 %v1648, %v1647
    %v1659 = vpack.c.b16 %v1650, %v1649
    %v1660 = vpack.c.b16 %v1652, %v1651
    %1669 = vmatprep.subr.bf16.mxu0 0
    %1670 = vmatpush1.bf16.msra.mxu0 %v1660
    %1671 = vmatprep.subr.bf16.mxu0 0
    %1672 = vmatpush1.bf16.msra.mxu0 %v1659
    %1673 = vmatprep.subr.bf16.mxu0 0
    %1674 = vmatpush1.bf16.msra.mxu0 %v1658
    %1675 = vmatprep.subr.bf16.mxu0 0
    %1676 = vmatpush1.bf16.msra.mxu0 %v1657
    %1677 = vmatprep.subr.bf16.mxu0 0
    %1678 = vmatpush1.bf16.msra.mxu0 %v1656
    %1679 = vmatprep.subr.bf16.mxu0 0
    %1680 = vmatpush1.bf16.msra.mxu0 %v1655
    %1681 = vmatprep.subr.bf16.mxu0 0
    %1682 = vmatpush1.bf16.msra.mxu0 %v1654
    %1683 = vmatprep.subr.bf16.mxu0 0
    %1684 = vmatpush1.bf16.msra.mxu0 %v1653
    %1685 = vmatprep.subr.bf16.mxu0 0
    %1686 = vmatpush2.bf16.msra.mxu0 0
    %1687 = vmatprep.subr.bf16.mxu0 0
    %1688 = vmatpush2.bf16.msra.mxu0 0
    %1689 = vmatprep.subr.bf16.mxu0 0
    %1690 = vmatpush2.bf16.msra.mxu0 0
    %1691 = vmatprep.subr.bf16.mxu0 0
    %1692 = vmatpush2.bf16.msra.mxu0 0
    %1693 = vmatprep.subr.bf16.mxu0 0
    %1694 = vmatpush2.bf16.msra.mxu0 0
    %1695 = vmatprep.subr.bf16.mxu0 0
    %1696 = vmatpush2.bf16.msra.mxu0 0
    %1697 = vmatprep.subr.bf16.mxu0 0
    %1698 = vmatpush2.bf16.msra.mxu0 0
    %1699 = vmatprep.subr.bf16.mxu0 0
    %1700 = vmatpush2.bf16.msra.mxu0 0
    %1701 = vmatprep.mubr.bf16.mxu0 0
    %1702 = vmatmul.mubr.bf16.gmra.mxu0 %v1596
    %v1703 = vpop.f32.mrf.mxu0
    %v1704 = vadd.f32 %v1619, %v1703
    %v1705 = vpop.f32.mrf.mxu0
    %v1706 = vpop.f32.mrf.mxu0
    %v1707 = vadd.f32 %v1619, %v1706
    %v1708 = vpop.f32.mrf.mxu0
    %1709 = vdwg.mxu0
    %v1710 = vmax.f32 %v1704, 0.0
    %v1711 = vmax.f32 %v1707, 0.0
    %v1712 = vpack.c.bf16 %v1711, %v1710
    %v1713 = vld [vmem:[%s11] sm:$0xf]
    %v1714 = vld [vmem:[%s11 + $0x4] sm:$0xf]
    %v1715 = vld [vmem:[%s11 + $0x8] sm:$0xf]
    %v1716 = vld [vmem:[%s11 + $0xc] sm:$0xf]
    %v1717 = vld [vmem:[%s11 + $0x10] sm:$0xf]
    %v1718 = vld [vmem:[%s11 + $0x14] sm:$0xf]
    %v1719 = vld [vmem:[%s11 + $0x18] sm:$0xf]
    %v1720 = vld [vmem:[%s11 + $0x1c] sm:$0xf]
    %v1721 = vld [vmem:[%s11 + $0x20] sm:$0xf]
    %v1722 = vld [vmem:[%s11 + $0x24] sm:$0xf]
    %v1723 = vld [vmem:[%s11 + $0x28] sm:$0xf]
    %v1724 = vld [vmem:[%s11 + $0x2c] sm:$0xf]
    %v1725 = vld [vmem:[%s11 + $0x30] sm:$0xf]
    %v1726 = vld [vmem:[%s11 + $0x34] sm:$0xf]
    %v1727 = vld [vmem:[%s11 + $0x38] sm:$0xf]
    %v1728 = vld [vmem:[%s11 + $0x3c] sm:$0xf]
    %v1729 = vld [vmem:[%s12] sm:$0x1]
    %v1731 = vlaneseq
    %v1732 = vshrl.u32 %v1731, 7
    %v1733 = vsub.s32 0, %v1732
    %v1734 = vrot.slane %v1729, %v1733
    %v1752 = vunpack.c.l.b16 %v1713
    %v1753 = vunpack.c.l.b16 %v1714
    %v1754 = vunpack.c.l.b16 %v1715
    %v1755 = vunpack.c.l.b16 %v1716
    %v1756 = vunpack.c.l.b16 %v1717
    %v1757 = vunpack.c.l.b16 %v1718
    %v1758 = vunpack.c.l.b16 %v1719
    %v1759 = vunpack.c.l.b16 %v1720
    %v1760 = vunpack.c.l.b16 %v1721
    %v1761 = vunpack.c.l.b16 %v1722
    %v1762 = vunpack.c.l.b16 %v1723
    %v1763 = vunpack.c.l.b16 %v1724
    %v1764 = vunpack.c.l.b16 %v1725
    %v1765 = vunpack.c.l.b16 %v1726
    %v1766 = vunpack.c.l.b16 %v1727
    %v1767 = vunpack.c.l.b16 %v1728
    %v1768 = vpack.c.b16 %v1753, %v1752
    %v1769 = vpack.c.b16 %v1755, %v1754
    %v1770 = vpack.c.b16 %v1757, %v1756
    %v1771 = vpack.c.b16 %v1759, %v1758
    %v1772 = vpack.c.b16 %v1761, %v1760
    %v1773 = vpack.c.b16 %v1763, %v1762
    %v1774 = vpack.c.b16 %v1765, %v1764
    %v1775 = vpack.c.b16 %v1767, %v1766
    %1784 = vmatprep.subr.bf16.mxu0 0
    %1785 = vmatpush1.bf16.msra.mxu0 %v1775
    %1786 = vmatprep.subr.bf16.mxu0 0
    %1787 = vmatpush1.bf16.msra.mxu0 %v1774
    %1788 = vmatprep.subr.bf16.mxu0 0
    %1789 = vmatpush1.bf16.msra.mxu0 %v1773
    %1790 = vmatprep.subr.bf16.mxu0 0
    %1791 = vmatpush1.bf16.msra.mxu0 %v1772
    %1792 = vmatprep.subr.bf16.mxu0 0
    %1793 = vmatpush1.bf16.msra.mxu0 %v1771
    %1794 = vmatprep.subr.bf16.mxu0 0
    %1795 = vmatpush1.bf16.msra.mxu0 %v1770
    %1796 = vmatprep.subr.bf16.mxu0 0
    %1797 = vmatpush1.bf16.msra.mxu0 %v1769
    %1798 = vmatprep.subr.bf16.mxu0 0
    %1799 = vmatpush1.bf16.msra.mxu0 %v1768
    %1800 = vmatprep.subr.bf16.mxu0 0
    %1801 = vmatpush2.bf16.msra.mxu0 0
    %1802 = vmatprep.subr.bf16.mxu0 0
    %1803 = vmatpush2.bf16.msra.mxu0 0
    %1804 = vmatprep.subr.bf16.mxu0 0
    %1805 = vmatpush2.bf16.msra.mxu0 0
    %1806 = vmatprep.subr.bf16.mxu0 0
    %1807 = vmatpush2.bf16.msra.mxu0 0
    %1808 = vmatprep.subr.bf16.mxu0 0
    %1809 = vmatpush2.bf16.msra.mxu0 0
    %1810 = vmatprep.subr.bf16.mxu0 0
    %1811 = vmatpush2.bf16.msra.mxu0 0
    %1812 = vmatprep.subr.bf16.mxu0 0
    %1813 = vmatpush2.bf16.msra.mxu0 0
    %1814 = vmatprep.subr.bf16.mxu0 0
    %1815 = vmatpush2.bf16.msra.mxu0 0
    %1816 = vmatprep.mubr.bf16.mxu0 0
    %1817 = vmatmul.mubr.bf16.gmra.mxu0 %v1712
    %v1818 = vpop.f32.mrf.mxu0
    %v1819 = vadd.f32 %v1734, %v1818
    %v1820 = vpop.f32.mrf.mxu0
    %v1821 = vpop.f32.mrf.mxu0
    %v1822 = vadd.f32 %v1734, %v1821
    %v1823 = vpop.f32.mrf.mxu0
    %1824 = vdwg.mxu0
    %1825 = vmax.xlane.f32.xlu0 %v1819
    %v1826 = vpop.xlane.xlu0 %1825
    %1827 = vmax.xlane.f32.xlu0 %v1822
    %v1828 = vpop.xlane.xlu0 %1827
    %v1829 = vsub.f32 %v1819, %v1826
    %v1830 = vsub.f32 %v1822, %v1828
    %v1831 = vmul.f32 %v1829, 1.442695
    %v1832 = vpow.pop %v1831
    %v1833 = vmul.f32 %v1830, 1.442695
    %v1834 = vpow.pop %v1833
    %1835 = vadd.xlane.f32.xlu0 %v1832
    %v1836 = vpop.xlane.xlu0 %1835
    %1837 = vadd.xlane.f32.xlu0 %v1834
    %v1838 = vpop.xlane.xlu0 %1837
    %v1839 = vrcp.pop %v1836
    %v1840 = vrcp.pop %v1838
    %v1841 = vmul.f32 %v1832, %v1839
    %v1842 = vmul.f32 %v1834, %v1840
    %v1843 = vld [vmem:[%s13] sm:$0xf]
    %v1844 = vld [vmem:[%s13 + $0x4] sm:$0xf]
    %v1845 = vld [vmem:[%s13 + $0x8] sm:$0xf]
    %v1846 = vld [vmem:[%s13 + $0xc] sm:$0xf]
    %v1847 = vld [vmem:[%s13 + $0x10] sm:$0xf]
    %v1848 = vld [vmem:[%s13 + $0x14] sm:$0xf]
    %v1849 = vld [vmem:[%s13 + $0x18] sm:$0xf]
    %v1850 = vld [vmem:[%s13 + $0x1c] sm:$0xf]
    %v1851 = vld [vmem:[%s13 + $0x20] sm:$0xf]
    %v1852 = vld [vmem:[%s13 + $0x24] sm:$0xf]
    %v1853 = vld [vmem:[%s13 + $0x28] sm:$0xf]
    %v1854 = vld [vmem:[%s13 + $0x2c] sm:$0xf]
    %v1855 = vld [vmem:[%s13 + $0x30] sm:$0xf]
    %v1856 = vld [vmem:[%s13 + $0x34] sm:$0xf]
    %v1857 = vld [vmem:[%s13 + $0x38] sm:$0xf]
    %v1858 = vld [vmem:[%s13 + $0x3c] sm:$0xf]
    %v1859 = vld [vmem:[%s14] sm:$0x1]
    %v1861 = vlaneseq
    %v1862 = vshrl.u32 %v1861, 7
    %v1863 = vsub.s32 0, %v1862
    %v1864 = vrot.slane %v1859, %v1863
    %v1882 = vunpack.c.l.b16 %v1843
    %v1883 = vunpack.c.l.b16 %v1844
    %v1884 = vunpack.c.l.b16 %v1845
    %v1885 = vunpack.c.l.b16 %v1846
    %v1886 = vunpack.c.l.b16 %v1847
    %v1887 = vunpack.c.l.b16 %v1848
    %v1888 = vunpack.c.l.b16 %v1849
    %v1889 = vunpack.c.l.b16 %v1850
    %v1890 = vunpack.c.l.b16 %v1851
    %v1891 = vunpack.c.l.b16 %v1852
    %v1892 = vunpack.c.l.b16 %v1853
    %v1893 = vunpack.c.l.b16 %v1854
    %v1894 = vunpack.c.l.b16 %v1855
    %v1895 = vunpack.c.l.b16 %v1856
    %v1896 = vunpack.c.l.b16 %v1857
    %v1897 = vunpack.c.l.b16 %v1858
    %v1898 = vpack.c.b16 %v1883, %v1882
    %v1899 = vpack.c.b16 %v1885, %v1884
    %v1900 = vpack.c.b16 %v1887, %v1886
    %v1901 = vpack.c.b16 %v1889, %v1888
    %v1902 = vpack.c.b16 %v1891, %v1890
    %v1903 = vpack.c.b16 %v1893, %v1892
    %v1904 = vpack.c.b16 %v1895, %v1894
    %v1905 = vpack.c.b16 %v1897, %v1896
    %1914 = vmatprep.subr.bf16.mxu0 0
    %1915 = vmatpush1.bf16.msra.mxu0 %v1905
    %1916 = vmatprep.subr.bf16.mxu0 0
    %1917 = vmatpush1.bf16.msra.mxu0 %v1904
    %1918 = vmatprep.subr.bf16.mxu0 0
    %1919 = vmatpush1.bf16.msra.mxu0 %v1903
    %1920 = vmatprep.subr.bf16.mxu0 0
    %1921 = vmatpush1.bf16.msra.mxu0 %v1902
    %1922 = vmatprep.subr.bf16.mxu0 0
    %1923 = vmatpush1.bf16.msra.mxu0 %v1901
    %1924 = vmatprep.subr.bf16.mxu0 0
    %1925 = vmatpush1.bf16.msra.mxu0 %v1900
    %1926 = vmatprep.subr.bf16.mxu0 0
    %1927 = vmatpush1.bf16.msra.mxu0 %v1899
    %1928 = vmatprep.subr.bf16.mxu0 0
    %1929 = vmatpush1.bf16.msra.mxu0 %v1898
    %1930 = vmatprep.subr.bf16.mxu0 0
    %1931 = vmatpush2.bf16.msra.mxu0 0
    %1932 = vmatprep.subr.bf16.mxu0 0
    %1933 = vmatpush2.bf16.msra.mxu0 0
    %1934 = vmatprep.subr.bf16.mxu0 0
    %1935 = vmatpush2.bf16.msra.mxu0 0
    %1936 = vmatprep.subr.bf16.mxu0 0
    %1937 = vmatpush2.bf16.msra.mxu0 0
    %1938 = vmatprep.subr.bf16.mxu0 0
    %1939 = vmatpush2.bf16.msra.mxu0 0
    %1940 = vmatprep.subr.bf16.mxu0 0
    %1941 = vmatpush2.bf16.msra.mxu0 0
    %1942 = vmatprep.subr.bf16.mxu0 0
    %1943 = vmatpush2.bf16.msra.mxu0 0
    %1944 = vmatprep.subr.bf16.mxu0 0
    %1945 = vmatpush2.bf16.msra.mxu0 0
    %1946 = vmatprep.mubr.bf16.mxu0 0
    %1947 = vmatmul.mubr.bf16.gmra.mxu0 %v1597
    %v1948 = vpop.f32.mrf.mxu0
    %v1949 = vadd.f32 %v1864, %v1948
    %v1950 = vpop.f32.mrf.mxu0
    %v1951 = vpop.f32.mrf.mxu0
    %v1952 = vadd.f32 %v1864, %v1951
    %v1953 = vpop.f32.mrf.mxu0
    %1954 = vdwg.mxu0
    %v1955 = vmax.f32 %v1949, 0.0
    %v1956 = vmax.f32 %v1952, 0.0
    %v1957 = vpack.c.bf16 %v1956, %v1955
    %v1958 = vld [vmem:[%s15] sm:$0xf]
    %v1959 = vld [vmem:[%s15 + $0x4] sm:$0xf]
    %v1960 = vld [vmem:[%s15 + $0x8] sm:$0xf]
    %v1961 = vld [vmem:[%s15 + $0xc] sm:$0xf]
    %v1962 = vld [vmem:[%s15 + $0x10] sm:$0xf]
    %v1963 = vld [vmem:[%s15 + $0x14] sm:$0xf]
    %v1964 = vld [vmem:[%s15 + $0x18] sm:$0xf]
    %v1965 = vld [vmem:[%s15 + $0x1c] sm:$0xf]
    %v1966 = vld [vmem:[%s15 + $0x20] sm:$0xf]
    %v1967 = vld [vmem:[%s15 + $0x24] sm:$0xf]
    %v1968 = vld [vmem:[%s15 + $0x28] sm:$0xf]
    %v1969 = vld [vmem:[%s15 + $0x2c] sm:$0xf]
    %v1970 = vld [vmem:[%s15 + $0x30] sm:$0xf]
    %v1971 = vld [vmem:[%s15 + $0x34] sm:$0xf]
    %v1972 = vld [vmem:[%s15 + $0x38] sm:$0xf]
    %v1973 = vld [vmem:[%s15 + $0x3c] sm:$0xf]
    %v1974 = vld [vmem:[%s16] sm:$0x1]
    %v1976 = vlaneseq
    %v1977 = vshrl.u32 %v1976, 7
    %v1978 = vsub.s32 0, %v1977
    %v1979 = vrot.slane %v1974, %v1978
    %v1997 = vunpack.c.l.b16 %v1958
    %v1998 = vunpack.c.l.b16 %v1959
    %v1999 = vunpack.c.l.b16 %v1960
    %v2000 = vunpack.c.l.b16 %v1961
    %v2001 = vunpack.c.l.b16 %v1962
    %v2002 = vunpack.c.l.b16 %v1963
    %v2003 = vunpack.c.l.b16 %v1964
    %v2004 = vunpack.c.l.b16 %v1965
    %v2005 = vunpack.c.l.b16 %v1966
    %v2006 = vunpack.c.l.b16 %v1967
    %v2007 = vunpack.c.l.b16 %v1968
    %v2008 = vunpack.c.l.b16 %v1969
    %v2009 = vunpack.c.l.b16 %v1970
    %v2010 = vunpack.c.l.b16 %v1971
    %v2011 = vunpack.c.l.b16 %v1972
    %v2012 = vunpack.c.l.b16 %v1973
    %v2013 = vpack.c.b16 %v1998, %v1997
    %v2014 = vpack.c.b16 %v2000, %v1999
    %v2015 = vpack.c.b16 %v2002, %v2001
    %v2016 = vpack.c.b16 %v2004, %v2003
    %v2017 = vpack.c.b16 %v2006, %v2005
    %v2018 = vpack.c.b16 %v2008, %v2007
    %v2019 = vpack.c.b16 %v2010, %v2009
    %v2020 = vpack.c.b16 %v2012, %v2011
    %2029 = vmatprep.subr.bf16.mxu0 0
    %2030 = vmatpush1.bf16.msra.mxu0 %v2020
    %2031 = vmatprep.subr.bf16.mxu0 0
    %2032 = vmatpush1.bf16.msra.mxu0 %v2019
    %2033 = vmatprep.subr.bf16.mxu0 0
    %2034 = vmatpush1.bf16.msra.mxu0 %v2018
    %2035 = vmatprep.subr.bf16.mxu0 0
    %2036 = vmatpush1.bf16.msra.mxu0 %v2017
    %2037 = vmatprep.subr.bf16.mxu0 0
    %2038 = vmatpush1.bf16.msra.mxu0 %v2016
    %2039 = vmatprep.subr.bf16.mxu0 0
    %2040 = vmatpush1.bf16.msra.mxu0 %v2015
    %2041 = vmatprep.subr.bf16.mxu0 0
    %2042 = vmatpush1.bf16.msra.mxu0 %v2014
    %2043 = vmatprep.subr.bf16.mxu0 0
    %2044 = vmatpush1.bf16.msra.mxu0 %v2013
    %2045 = vmatprep.subr.bf16.mxu0 0
    %2046 = vmatpush2.bf16.msra.mxu0 0
    %2047 = vmatprep.subr.bf16.mxu0 0
    %2048 = vmatpush2.bf16.msra.mxu0 0
    %2049 = vmatprep.subr.bf16.mxu0 0
    %2050 = vmatpush2.bf16.msra.mxu0 0
    %2051 = vmatprep.subr.bf16.mxu0 0
    %2052 = vmatpush2.bf16.msra.mxu0 0
    %2053 = vmatprep.subr.bf16.mxu0 0
    %2054 = vmatpush2.bf16.msra.mxu0 0
    %2055 = vmatprep.subr.bf16.mxu0 0
    %2056 = vmatpush2.bf16.msra.mxu0 0
    %2057 = vmatprep.subr.bf16.mxu0 0
    %2058 = vmatpush2.bf16.msra.mxu0 0
    %2059 = vmatprep.subr.bf16.mxu0 0
    %2060 = vmatpush2.bf16.msra.mxu0 0
    %2061 = vmatprep.mubr.bf16.mxu0 0
    %2062 = vmatmul.mubr.bf16.gmra.mxu0 %v1957
    %v2063 = vpop.f32.mrf.mxu0
    %v2064 = vadd.f32 %v1979, %v2063
    %v2065 = vpop.f32.mrf.mxu0
    %v2066 = vpop.f32.mrf.mxu0
    %v2067 = vadd.f32 %v1979, %v2066
    %v2068 = vpop.f32.mrf.mxu0
    %2069 = vdwg.mxu0
    %2070 = vmax.xlane.f32.xlu0 %v2064
    %v2071 = vpop.xlane.xlu0 %2070
    %2072 = vmax.xlane.f32.xlu0 %v2067
    %v2073 = vpop.xlane.xlu0 %2072
    %v2074 = vsub.f32 %v2064, %v2071
    %v2075 = vsub.f32 %v2067, %v2073
    %v2076 = vmul.f32 %v2074, 1.442695
    %v2077 = vpow.pop %v2076
    %v2078 = vmul.f32 %v2075, 1.442695
    %v2079 = vpow.pop %v2078
    %2080 = vadd.xlane.f32.xlu0 %v2077
    %v2081 = vpop.xlane.xlu0 %2080
    %2082 = vadd.xlane.f32.xlu0 %v2079
    %v2083 = vpop.xlane.xlu0 %2082
    %v2084 = vrcp.pop %v2081
    %v2085 = vrcp.pop %v2083
    %v2086 = vmul.f32 %v2077, %v2084
    %v2087 = vmul.f32 %v2079, %v2085
    %v2088 = vpack.c.bf16 %v1842, %v1841
    %v2090 = vunpack.c.l.b16 %v2088
    %v2091 = vunpack.c.h.b16 %v2088
    %v2092 = vpack.c.b16 %v2090, %v2090
    %v2093 = vpack.c.b16 %v2091, %v2091
    %2096 = vst [vmem:[%s17] sm:$0xf] %v2092
    %2097 = vst [vmem:[%s17 + $0x4] sm:$0xf] %v2093
    %v2098 = vpack.c.bf16 %v2087, %v2086
    %v2100 = vunpack.c.l.b16 %v2098
    %v2101 = vunpack.c.h.b16 %v2098
    %v2102 = vpack.c.b16 %v2100, %v2100
    %v2103 = vpack.c.b16 %v2101, %v2101
    %s2106 = scalar_lea.vmem %s17, 8
    %2107 = vst [vmem:[%s2106] sm:$0xf] %v2102
    %2108 = vst [vmem:[%s2106 + $0x4] sm:$0xf] %v2103
    // Predicated region
    $region74: #{model_forward.1} parent=1 // pred_check
      _
    $region75: #{model_forward.1} parent=1 // pred_check_branch
      %2110 = sbr.rel (0) target = $region77
    $region76: #{model_forward.1} parent=1 // pred_region
      _
    $region77: #{model_forward.1} parent=1 // pred_fallthru
      _
    // Predicated region
    $region78: #{model_forward.1} parent=1 // pred_check
      _
    $region79: #{model_forward.1} parent=1 // pred_check_branch
      %2112 = sbr.rel (0) target = $region81
    $region80: #{model_forward.1} parent=1 // pred_region
      _
    $region81: #{model_forward.1} parent=1 // pred_fallthru
      _
    %2113 = vsyncpa [#allocation3], 1

</llo_original>
